<compile_context>
chip_gen: v7x
topology: tpu7x:2x2x1
jax: 0.10.0
libtpu: 0.0.40
codegen_flags: <defaults>
</compile_context>

<pallas_src>
import jax
import jax.numpy as jnp
from jax import lax
from jax.experimental import pallas as pl
from jax.experimental.pallas import tpu as pltpu

D_PAD_MIN = 128   # minimum lane padding for the dim axis
MLP_W = 32        # padded width of each step_size MLP layer (real 12/30/20/10/8)
CONV_W = 32       # padded channel count of the 1x1-conv update net (real 8/20/2)
FEAT_W = 16       # padded width of the 12-entry feature vector / reduction-lane count
EPS = 1e-20


def _soft_threshold(v, tau):
    # sign(v) * max(|v| - tau, 0), written sign-free (identical at v == 0).
    return jnp.where(v >= 0.0, 1.0, -1.0) * jnp.maximum(jnp.abs(v) - tau, 0.0)


def _dot_t(a, b):
    """a @ b.T on the MXU (contract the last/lane dims of both operands)."""
    return lax.dot_general(a, b, (((1,), (1,)), ((), ())),
                           preferred_element_type=jnp.float32)


def _t_dot(a, b):
    """a.T @ b on the MXU (contract the first/sublane dims of both operands)."""
    return lax.dot_general(a, b, (((0,), (0,)), ((), ())),
                           preferred_element_type=jnp.float32)


def _sparsity_net_kernel(scal_ref, a_ref, b_ref, xs_ref, wm_ref, wc_ref,
                         out_ref, s_ref):
    mu = scal_ref[0]
    L = scal_ref[1]
    eps = jnp.float32(EPS)

    A = a_ref[...]                 # (n_pad, d_pad)
    b = b_ref[...]                 # (n_pad, 1)
    xs = xs_ref[...]               # (8, d_pad): row0 = x_k, row1 = x_old, rest 0
    xk = xs[0:1, :]                # (1, d_pad)  == current_state[1]
    xo = xs[1:2, :]                # (1, d_pad)  == current_state[0]
    d_pad = xk.shape[1]
    n_pad = A.shape[0]

    zeros_f = (xk == 0.0).astype(jnp.float32)
    nonzeros_f = 1.0 - zeros_f
    diff = xk - xo

    # --- residuals, smooth losses, gradient -- all on the MXU -----------------
    R = _dot_t(A, xs)              # (n_pad, 8): col0 = A x_k, col1 = A x_old
    Rr = R - b                     # residuals; cols >= 2 hold -b and are ignored
    GA = _t_dot(Rr, A)             # (8, d_pad): row0 = A^T (A x_k - b) = grad
    grad = GA[0:1, :]
    ones_n = jnp.ones((1, n_pad), jnp.float32)
    rsq = jnp.dot(ones_n, Rr * Rr,
                  preferred_element_type=jnp.float32)        # (1, 8): lanes 0,1 used

    # --- prox / stopping criterion, BEFORE the fused reduction ----------------
    # Uses raw grad in place of ||grad|| * (grad/||grad||); identical unless
    # ||grad|| <= 1e-20 (then both are ~0), so the eps-branch collapses.
    tau = mu / L
    prox = _soft_threshold(xk - grad / L, tau)
    stop = xk - prox

    # --- ONE fused reduction matvec: q[lane] = sum_d P[lane, d] ---------------
    g2v = grad * grad
    d2v = diff * diff
    s2v = stop * stop
    gdv = grad * diff
    s_ref[0:1, :] = jnp.abs(xk)          # q0  = sum|x_k|
    s_ref[1:2, :] = jnp.abs(xo)          # q1  = sum|x_old|
    s_ref[2:3, :] = d2v                  # q2  = ||diff||^2
    s_ref[3:4, :] = g2v                  # q3  = ||grad||^2
    s_ref[4:5, :] = g2v * zeros_f        # q4  = ||grad*zero||^2     (feature lane 4)
    s_ref[5:6, :] = g2v * nonzeros_f     # q5  = ||grad*nonzero||^2  (feature lane 5)
    s_ref[6:7, :] = d2v * zeros_f        # q6  = ||diff*zero||^2     (feature lane 6)
    s_ref[7:8, :] = d2v * nonzeros_f     # q7  = ||diff*nonzero||^2  (feature lane 7)
    s_ref[8:9, :] = s2v * zeros_f        # q8  = ||stop*zero||^2     (feature lane 8)
    s_ref[9:10, :] = s2v * nonzeros_f    # q9  = ||stop*nonzero||^2  (feature lane 9)
    s_ref[10:11, :] = gdv * zeros_f      # q10 = <grad*z, diff*z>
    s_ref[11:12, :] = gdv * nonzeros_f   # q11 = <grad*nz, diff*nz>
    s_ref[12:13, :] = s2v                # q12 = ||stop||^2
    s_ref[13:16, :] = jnp.zeros((3, d_pad), jnp.float32)

    ones_d = jnp.ones((1, d_pad), jnp.float32)
    q = _dot_t(ones_d, s_ref[...])       # (1, FEAT_W)
    qs = jnp.sqrt(jnp.maximum(q, 0.0))   # lane-parallel sqrt of every reduction

    d_n = qs[0:1, 2:3]                   # ||diff||
    g_n = qs[0:1, 3:4]                   # ||grad||
    s_n = qs[0:1, 12:13]                 # ||stop||
    inv_d = jnp.where(d_n > eps, 1.0 / d_n, 1.0)
    inv_g = jnp.where(g_n > eps, 1.0 / g_n, 1.0)
    inv_s = jnp.where(s_n > eps, 1.0 / s_n, 1.0)
    inv_gd = inv_g * inv_d

    smooth_k = 0.5 * rsq[0:1, 0:1]
    smooth_o = 0.5 * rsq[0:1, 1:2]
    nons_k = mu * q[0:1, 0:1]
    nons_o = mu * q[0:1, 1:2]
    loss_k = smooth_k + nons_k
    loss_o = smooth_o + nons_o
    dot_zero = q[0:1, 10:11] * inv_gd
    dot_nonzero = q[0:1, 11:12] * inv_gd

    # --- feature vector: two vector log passes + a few masked placements ------
    lane = lax.broadcasted_iota(jnp.int32, (1, FEAT_W), 1)
    norm_mask = (lane >= 4) & (lane <= 9)
    larg_o = (jnp.where(norm_mask, qs, 0.0)
              + jnp.where(lane == 1, loss_o, 0.0)
              + jnp.where(lane == 2, smooth_o, 0.0)
              + jnp.where(lane == 3, nons_o, 0.0))
    larg_k = (jnp.where(lane == 1, loss_k, 0.0)
              + jnp.where(lane == 2, smooth_k, 0.0)
              + jnp.where(lane == 3, nons_k, 0.0))
    feat = jnp.log(1.0 + larg_o) - jnp.log(1.0 + larg_k)
    feat = (feat
            + jnp.where(lane == 0, mu, 0.0)
            + jnp.where(lane == 10, dot_zero, 0.0)
            + jnp.where(lane == 11, dot_nonzero, 0.0))       # (1, 16)

    # --- step_size MLP (four padded 32x32 weights stacked along sublanes) -----
    h = jnp.maximum(jnp.dot(feat, wm_ref[0:FEAT_W, :],
                            preferred_element_type=jnp.float32), 0.0)
    h = jnp.maximum(jnp.dot(h, wm_ref[32:64, :],
                            preferred_element_type=jnp.float32), 0.0)
    h = jnp.maximum(jnp.dot(h, wm_ref[64:96, :],
                            preferred_element_type=jnp.float32), 0.0)
    alpha = jnp.dot(h, wm_ref[96:128, :],
                    preferred_element_type=jnp.float32)      # (1, 32); lanes 0..7 valid

    # --- conv "update" net: alpha folded into the first 1x1-conv weight -------
    grad_n = grad * inv_g
    diff_n = diff * inv_d
    stop_n = stop * inv_s
    gz = grad_n * zeros_f
    gnz = grad_n * nonzeros_f
    sz = stop_n * zeros_f
    snz = stop_n * nonzeros_f
    dz = diff_n * zeros_f
    dnz = diff_n * nonzeros_f

    # reuse the (now dead) reduction slab rows 0..7 for the 8 conv input channels
    s_ref[0:1, :] = gz
    s_ref[1:2, :] = gnz
    s_ref[2:3, :] = sz
    s_ref[3:4, :] = snz
    s_ref[4:5, :] = dz
    s_ref[5:6, :] = dnz
    s_ref[6:7, :] = gnz * dnz
    s_ref[7:8, :] = gz * dz
    X = s_ref[0:8, :]

    # conv is linear in its input channels, so scaling column i of W1 by alpha[i]
    # is identical to scaling channel i of X by alpha[i].
    w1c = wc_ref[0:32, :][:, 0:8] * alpha[0:1, 0:8]          # (32, 8)
    H = jnp.maximum(jnp.dot(w1c, X, preferred_element_type=jnp.float32), 0.0)
    H = jnp.maximum(jnp.dot(wc_ref[32:64, :], H, preferred_element_type=jnp.float32), 0.0)
    H = jnp.maximum(jnp.dot(wc_ref[64:96, :], H, preferred_element_type=jnp.float32), 0.0)
    Dir = jnp.dot(wc_ref[96:128, :], H, preferred_element_type=jnp.float32)  # rows 0,1 valid

    dir_1 = Dir[0:1, :] * zeros_f
    dir_2 = Dir[1:2, :] * nonzeros_f

    out_ref[...] = _soft_threshold(xk + (dir_1 - grad + d_n * dir_2) / L, tau)


def _round_up(x, m):
    return ((x + m - 1) // m) * m


def _pad2d(w, shape):
    out = jnp.zeros(shape, jnp.float32)
    return out.at[: w.shape[0], : w.shape[1]].set(w.astype(jnp.float32))


def prepare_weights(params):
    """Pad + stack the 8 weight matrices ONCE (outside the per-call path)."""
    (w1m, w2m, w3m, w4m, w1c, w2c, w3c, w4c) = params
    wm = jnp.concatenate([_pad2d(w, (MLP_W, MLP_W)) for w in (w1m, w2m, w3m, w4m)],
                         axis=0)                              # (128, 32)
    wc = jnp.concatenate([_pad2d(w, (CONV_W, CONV_W)) for w in (w1c, w2c, w3c, w4c)],
                         axis=0)                              # (128, 32)
    return wm, wc


def sparsity_net_forward(A, b, x_old, x_k, mu, smoothness, wm, wc):
    N, dim = A.shape
    d_pad = max(D_PAD_MIN, _round_up(dim, 128))
    n_pad = _round_up(N, 8)

    A_p = jnp.zeros((n_pad, d_pad), jnp.float32).at[:N, :dim].set(A.astype(jnp.float32))
    b_p = jnp.zeros((n_pad, 1), jnp.float32).at[:N, 0].set(b.astype(jnp.float32))
    xs_p = jnp.zeros((8, d_pad), jnp.float32)
    xs_p = xs_p.at[0, :dim].set(x_k.astype(jnp.float32))
    xs_p = xs_p.at[1, :dim].set(x_old.astype(jnp.float32))
    scal = jnp.array([mu, smoothness], jnp.float32)

    smem_spec = pl.BlockSpec(memory_space=pltpu.MemorySpace.SMEM)
    vmem_spec = pl.BlockSpec(memory_space=pltpu.MemorySpace.VMEM)

    out = pl.pallas_call(
        _sparsity_net_kernel,
        out_shape=jax.ShapeDtypeStruct((1, d_pad), jnp.float32),
        in_specs=[smem_spec] + [vmem_spec] * 5,
        out_specs=vmem_spec,
        scratch_shapes=[
            pltpu.VMEM((FEAT_W, d_pad), jnp.float32),  # reduction slab, reused for conv input
        ],
    )(scal, A_p, b_p, xs_p, wm, wc)
    return out[0, :dim]


def reference_forward(A, b, x_old, x_k, mu, L, params):
    """Plain-JAX mirror of SparsityNet.forward (for correctness checking)."""
    (w1m, w2m, w3m, w4m, w1c, w2c, w3c, w4c) = params
    eps = EPS

    def soft(v, tau):
        return jnp.where(v >= 0.0, 1.0, -1.0) * jnp.maximum(jnp.abs(v) - tau, 0.0)

    def smooth(x):
        return 0.5 * jnp.sum((A @ x - b) ** 2)

    def nonsmooth(x):
        return mu * jnp.sum(jnp.abs(x))

    sm_k, sm_o = smooth(x_k), smooth(x_old)
    ns_k, ns_o = nonsmooth(x_k), nonsmooth(x_old)
    loss_k, loss_o = sm_k + ns_k, sm_o + ns_o

    zeros = (x_k == 0.0)
    nonz = (x_k != 0.0)

    diff = x_k - x_old
    dn = jnp.linalg.norm(diff)
    diffn = diff / jnp.where(dn > eps, dn, 1.0)
    d0 = jnp.where(zeros, diffn, 0.0)
    d1 = jnp.where(nonz, diffn, 0.0)
    d0n, d1n = dn * jnp.linalg.norm(d0), dn * jnp.linalg.norm(d1)

    grad = A.T @ (A @ x_k - b)
    gn = jnp.linalg.norm(grad)
    gradn = grad / jnp.where(gn > eps, gn, 1.0)
    g0 = jnp.where(zeros, gradn, 0.0)
    g1 = jnp.where(nonz, gradn, 0.0)
    g0n, g1n = gn * jnp.linalg.norm(g0), gn * jnp.linalg.norm(g1)

    tau = mu / L
    prox = soft(x_k - gn * gradn / L, tau)
    stop = x_k - prox
    sn = jnp.linalg.norm(stop)
    stopn = stop / jnp.where(sn > eps, sn, 1.0)
    s0 = jnp.where(zeros, stopn, 0.0)
    s1 = jnp.where(nonz, stopn, 0.0)
    s0n, s1n = sn * jnp.linalg.norm(s0), sn * jnp.linalg.norm(s1)

    feat = jnp.stack([
        mu,
        jnp.log(1.0 + loss_o) - jnp.log(1.0 + loss_k),
        jnp.log(1.0 + sm_o) - jnp.log(1.0 + sm_k),
        jnp.log(1.0 + ns_o) - jnp.log(1.0 + ns_k),
        jnp.log(1.0 + g0n), jnp.log(1.0 + g1n),
        jnp.log(1.0 + d0n), jnp.log(1.0 + d1n),
        jnp.log(1.0 + s0n), jnp.log(1.0 + s1n),
        jnp.dot(g0, d0), jnp.dot(g1, d1),
    ])
    h = jax.nn.relu(feat @ w1m)
    h = jax.nn.relu(h @ w2m)
    h = jax.nn.relu(h @ w3m)
    alpha = h @ w4m

    X = jnp.stack([
        alpha[0] * g0, alpha[1] * g1, alpha[2] * s0, alpha[3] * s1,
        alpha[4] * d0, alpha[5] * d1, alpha[6] * (g1 * d1), alpha[7] * (g0 * d0),
    ], axis=0)
    H = jax.nn.relu(w1c @ X)
    H = jax.nn.relu(w2c @ H)
    H = jax.nn.relu(w3c @ H)
    Dir = w4c @ H

    dir1 = Dir[0] * zeros.astype(jnp.float32)
    dir2 = Dir[1] * nonz.astype(jnp.float32)
    return soft(x_k + (dir1 - gn * gradn + dn * dir2) / L, tau)


if __name__ == "__main__":
    dim, N = 16, 24          # problem size: x in R^16, A is 24x16
    mu, L = 0.1, 10.0        # l1 regularization parameter and smoothness constant

    key = jax.random.PRNGKey(0)
    ks = jax.random.split(key, 12)
    scale = 0.3
    # step_size MLP weights, stored transposed (in, out) so forward is x @ W
    w1m = scale * jax.random.normal(ks[0], (12, 30), jnp.float32)
    w2m = scale * jax.random.normal(ks[1], (30, 20), jnp.float32)
    w3m = scale * jax.random.normal(ks[2], (20, 10), jnp.float32)
    w4m = scale * jax.random.normal(ks[3], (10, 8), jnp.float32)
    # update 1x1-conv weights, stored (out_ch, in_ch)
    w1c = scale * jax.random.normal(ks[4], (20, 8), jnp.float32)
    w2c = scale * jax.random.normal(ks[5], (20, 20), jnp.float32)
    w3c = scale * jax.random.normal(ks[6], (20, 20), jnp.float32)
    w4c = scale * jax.random.normal(ks[7], (2, 20), jnp.float32)
    params = (w1m, w2m, w3m, w4m, w1c, w2c, w3c, w4c)

    A = jax.random.normal(ks[8], (N, dim), jnp.float32) / jnp.sqrt(dim)
    b = jax.random.normal(ks[9], (N,), jnp.float32)
    x_old = jax.random.normal(ks[10], (dim,), jnp.float32)
    raw = jax.random.normal(ks[11], (dim,), jnp.float32)
    x_k = jnp.where(jnp.abs(raw) > 0.7, raw, 0.0)   # exact zeros so the sparsity masks are exercised

    wm_p, wc_p = prepare_weights(params)            # pad + stack once, outside the hot path
    out = jax.block_until_ready(
        sparsity_net_forward(A, b, x_old, x_k, mu, L, wm_p, wc_p))
    ref = reference_forward(A, b, x_old, x_k, jnp.float32(mu), jnp.float32(L), params)

    assert out.shape == (dim,)
    assert bool(jnp.all(jnp.isfinite(out)))
    assert jnp.allclose(out, ref, rtol=2e-3, atol=2e-3), (out, ref)
    print("KERNEL_OK")
</pallas_src>

<mosaic_0001>
module attributes {stable_mosaic.version = 11 : i64} {
  func.func @_sparsity_net_kernel(%arg0: memref<2xf32, #tpu.memory_space<smem>>, %arg1: memref<24x128xf32, #tpu.memory_space<vmem>>, %arg2: memref<24x1xf32, #tpu.memory_space<vmem>>, %arg3: memref<8x128xf32, #tpu.memory_space<vmem>>, %arg4: memref<128x32xf32, #tpu.memory_space<vmem>>, %arg5: memref<128x32xf32, #tpu.memory_space<vmem>>, %arg6: memref<1x128xf32, #tpu.memory_space<vmem>>, %arg7: memref<16x128xf32, #tpu.memory_space<vmem>>) attributes {dimension_semantics = [], scalar_prefetch = 0 : i64, scratch_operands = 1 : i64, tpu.core_type = #tpu.core_type<tc>} {
    %c0 = arith.constant 0 : index
    %0 = memref.load %arg0[%c0] : memref<2xf32, #tpu.memory_space<smem>>
    %c1 = arith.constant 1 : index
    %1 = memref.load %arg0[%c1] : memref<2xf32, #tpu.memory_space<smem>>
    %c0_0 = arith.constant 0 : index
    %c0_1 = arith.constant 0 : index
    %2 = vector.load %arg1[%c0_0, %c0_1] : memref<24x128xf32, #tpu.memory_space<vmem>>, vector<24x128xf32>
    %c0_2 = arith.constant 0 : index
    %c0_3 = arith.constant 0 : index
    %3 = vector.load %arg2[%c0_2, %c0_3] : memref<24x1xf32, #tpu.memory_space<vmem>>, vector<24x1xf32>
    %c0_4 = arith.constant 0 : index
    %c0_5 = arith.constant 0 : index
    %4 = vector.load %arg3[%c0_4, %c0_5] : memref<8x128xf32, #tpu.memory_space<vmem>>, vector<8x128xf32>
    %5 = vector.extract_strided_slice %4 {offsets = [0, 0], sizes = [1, 128], strides = [1, 1]} : vector<8x128xf32> to vector<1x128xf32>
    %6 = vector.extract_strided_slice %4 {offsets = [1, 0], sizes = [1, 128], strides = [1, 1]} : vector<8x128xf32> to vector<1x128xf32>
    %cst = arith.constant 0.000000e+00 : f32
    %7 = vector.broadcast %cst : f32 to vector<1x128xf32>
    %8 = arith.cmpf oeq, %5, %7 : vector<1x128xf32>
    %9 = arith.extui %8 : vector<1x128xi1> to vector<1x128xi32>
    %10 = arith.sitofp %9 : vector<1x128xi32> to vector<1x128xf32>
    %cst_6 = arith.constant 1.000000e+00 : f32
    %11 = vector.broadcast %cst_6 : f32 to vector<1x128xf32>
    %12 = arith.subf %11, %10 : vector<1x128xf32>
    %13 = arith.subf %5, %6 : vector<1x128xf32>
    %cst_7 = arith.constant dense<0.000000e+00> : vector<24x8xf32>
    %14 = tpu.matmul %2, %4, %cst_7 {dimension_numbers = #tpu.dot_dimension_numbers<[1], [1], [0], [0], [0, 0, 1, 0], [], []>} : vector<24x128xf32>, vector<8x128xf32>, vector<24x8xf32> -> vector<24x8xf32>
    %15 = vector.broadcast %3 : vector<24x1xf32> to vector<24x8xf32>
    %16 = arith.subf %14, %15 : vector<24x8xf32>
    %cst_8 = arith.constant dense<0.000000e+00> : vector<8x128xf32>
    %17 = tpu.matmul %16, %2, %cst_8 {dimension_numbers = #tpu.dot_dimension_numbers<[0], [0], [1], [1], [0, 1, 1, 1], [], []>} : vector<24x8xf32>, vector<24x128xf32>, vector<8x128xf32> -> vector<8x128xf32>
    %18 = vector.extract_strided_slice %17 {offsets = [0, 0], sizes = [1, 128], strides = [1, 1]} : vector<8x128xf32> to vector<1x128xf32>
    %cst_9 = arith.constant 1.000000e+00 : f32
    %19 = vector.broadcast %cst_9 : f32 to vector<1x24xf32>
    %20 = arith.mulf %16, %16 : vector<24x8xf32>
    %cst_10 = arith.constant dense<0.000000e+00> : vector<1x8xf32>
    %21 = tpu.matmul %19, %20, %cst_10 {dimension_numbers = #tpu.dot_dimension_numbers<[1], [0], [0], [1], [0, 0, 1, 1], [], []>} : vector<1x24xf32>, vector<24x8xf32>, vector<1x8xf32> -> vector<1x8xf32>
    %22 = arith.divf %0, %1 : f32
    %23 = vector.broadcast %1 : f32 to vector<1x128xf32>
    %24 = arith.divf %18, %23 : vector<1x128xf32>
    %25 = arith.subf %5, %24 : vector<1x128xf32>
    %cst_11 = arith.constant 0.000000e+00 : f32
    %26 = vector.broadcast %cst_11 : f32 to vector<1x128xf32>
    %27 = arith.cmpf oge, %25, %26 : vector<1x128xf32>
    %cst_12 = arith.constant 1.000000e+00 : f32
    %cst_13 = arith.constant -1.000000e+00 : f32
    %28 = vector.broadcast %cst_12 : f32 to vector<1x128xf32>
    %29 = vector.broadcast %cst_13 : f32 to vector<1x128xf32>
    %30 = arith.select %27, %28, %29 : vector<1x128xi1>, vector<1x128xf32>
    %31 = math.absf %25 : vector<1x128xf32>
    %32 = vector.broadcast %22 : f32 to vector<1x128xf32>
    %33 = arith.subf %31, %32 : vector<1x128xf32>
    %cst_14 = arith.constant 0.000000e+00 : f32
    %34 = vector.broadcast %cst_14 : f32 to vector<1x128xf32>
    %35 = arith.maximumf %33, %34 : vector<1x128xf32>
    %36 = arith.mulf %30, %35 : vector<1x128xf32>
    %37 = arith.subf %5, %36 : vector<1x128xf32>
    %38 = arith.mulf %18, %18 : vector<1x128xf32>
    %39 = arith.mulf %13, %13 : vector<1x128xf32>
    %40 = arith.mulf %37, %37 : vector<1x128xf32>
    %41 = arith.mulf %18, %13 : vector<1x128xf32>
    %42 = math.absf %5 : vector<1x128xf32>
    %c0_15 = arith.constant 0 : index
    %c0_16 = arith.constant 0 : index
    %43 = vector.load %arg7[%c0_15, %c0_16] : memref<16x128xf32, #tpu.memory_space<vmem>>, vector<1x128xf32>
    tpu.vector_store %arg7[%c0_15, %c0_16], %42 {strides = array<i32>} : memref<16x128xf32, #tpu.memory_space<vmem>>, vector<1x128xf32>,
    %44 = math.absf %6 : vector<1x128xf32>
    %c1_17 = arith.constant 1 : index
    %c0_18 = arith.constant 0 : index
    %45 = vector.load %arg7[%c1_17, %c0_18] : memref<16x128xf32, #tpu.memory_space<vmem>>, vector<1x128xf32>
    tpu.vector_store %arg7[%c1_17, %c0_18], %44 {strides = array<i32>} : memref<16x128xf32, #tpu.memory_space<vmem>>, vector<1x128xf32>,
    %c2 = arith.constant 2 : index
    %c0_19 = arith.constant 0 : index
    %46 = vector.load %arg7[%c2, %c0_19] : memref<16x128xf32, #tpu.memory_space<vmem>>, vector<1x128xf32>
    tpu.vector_store %arg7[%c2, %c0_19], %39 {strides = array<i32>} : memref<16x128xf32, #tpu.memory_space<vmem>>, vector<1x128xf32>,
    %c3 = arith.constant 3 : index
    %c0_20 = arith.constant 0 : index
    %47 = vector.load %arg7[%c3, %c0_20] : memref<16x128xf32, #tpu.memory_space<vmem>>, vector<1x128xf32>
    tpu.vector_store %arg7[%c3, %c0_20], %38 {strides = array<i32>} : memref<16x128xf32, #tpu.memory_space<vmem>>, vector<1x128xf32>,
    %48 = arith.mulf %38, %10 : vector<1x128xf32>
    %c4 = arith.constant 4 : index
    %c0_21 = arith.constant 0 : index
    %49 = vector.load %arg7[%c4, %c0_21] : memref<16x128xf32, #tpu.memory_space<vmem>>, vector<1x128xf32>
    tpu.vector_store %arg7[%c4, %c0_21], %48 {strides = array<i32>} : memref<16x128xf32, #tpu.memory_space<vmem>>, vector<1x128xf32>,
    %50 = arith.mulf %38, %12 : vector<1x128xf32>
    %c5 = arith.constant 5 : index
    %c0_22 = arith.constant 0 : index
    %51 = vector.load %arg7[%c5, %c0_22] : memref<16x128xf32, #tpu.memory_space<vmem>>, vector<1x128xf32>
    tpu.vector_store %arg7[%c5, %c0_22], %50 {strides = array<i32>} : memref<16x128xf32, #tpu.memory_space<vmem>>, vector<1x128xf32>,
    %52 = arith.mulf %39, %10 : vector<1x128xf32>
    %c6 = arith.constant 6 : index
    %c0_23 = arith.constant 0 : index
    %53 = vector.load %arg7[%c6, %c0_23] : memref<16x128xf32, #tpu.memory_space<vmem>>, vector<1x128xf32>
    tpu.vector_store %arg7[%c6, %c0_23], %52 {strides = array<i32>} : memref<16x128xf32, #tpu.memory_space<vmem>>, vector<1x128xf32>,
    %54 = arith.mulf %39, %12 : vector<1x128xf32>
    %c7 = arith.constant 7 : index
    %c0_24 = arith.constant 0 : index
    %55 = vector.load %arg7[%c7, %c0_24] : memref<16x128xf32, #tpu.memory_space<vmem>>, vector<1x128xf32>
    tpu.vector_store %arg7[%c7, %c0_24], %54 {strides = array<i32>} : memref<16x128xf32, #tpu.memory_space<vmem>>, vector<1x128xf32>,
    %56 = arith.mulf %40, %10 : vector<1x128xf32>
    %c8 = arith.constant 8 : index
    %c0_25 = arith.constant 0 : index
    %57 = vector.load %arg7[%c8, %c0_25] : memref<16x128xf32, #tpu.memory_space<vmem>>, vector<1x128xf32>
    tpu.vector_store %arg7[%c8, %c0_25], %56 {strides = array<i32>} : memref<16x128xf32, #tpu.memory_space<vmem>>, vector<1x128xf32>,
    %58 = arith.mulf %40, %12 : vector<1x128xf32>
    %c9 = arith.constant 9 : index
    %c0_26 = arith.constant 0 : index
    %59 = vector.load %arg7[%c9, %c0_26] : memref<16x128xf32, #tpu.memory_space<vmem>>, vector<1x128xf32>
    tpu.vector_store %arg7[%c9, %c0_26], %58 {strides = array<i32>} : memref<16x128xf32, #tpu.memory_space<vmem>>, vector<1x128xf32>,
    %60 = arith.mulf %41, %10 : vector<1x128xf32>
    %c10 = arith.constant 10 : index
    %c0_27 = arith.constant 0 : index
    %61 = vector.load %arg7[%c10, %c0_27] : memref<16x128xf32, #tpu.memory_space<vmem>>, vector<1x128xf32>
    tpu.vector_store %arg7[%c10, %c0_27], %60 {strides = array<i32>} : memref<16x128xf32, #tpu.memory_space<vmem>>, vector<1x128xf32>,
    %62 = arith.mulf %41, %12 : vector<1x128xf32>
    %c11 = arith.constant 11 : index
    %c0_28 = arith.constant 0 : index
    %63 = vector.load %arg7[%c11, %c0_28] : memref<16x128xf32, #tpu.memory_space<vmem>>, vector<1x128xf32>
    tpu.vector_store %arg7[%c11, %c0_28], %62 {strides = array<i32>} : memref<16x128xf32, #tpu.memory_space<vmem>>, vector<1x128xf32>,
    %c12 = arith.constant 12 : index
    %c0_29 = arith.constant 0 : index
    %64 = vector.load %arg7[%c12, %c0_29] : memref<16x128xf32, #tpu.memory_space<vmem>>, vector<1x128xf32>
    tpu.vector_store %arg7[%c12, %c0_29], %40 {strides = array<i32>} : memref<16x128xf32, #tpu.memory_space<vmem>>, vector<1x128xf32>,
    %cst_30 = arith.constant 0.000000e+00 : f32
    %65 = vector.broadcast %cst_30 : f32 to vector<3x128xf32>
    %c13 = arith.constant 13 : index
    %c0_31 = arith.constant 0 : index
    %66 = vector.load %arg7[%c13, %c0_31] : memref<16x128xf32, #tpu.memory_space<vmem>>, vector<3x128xf32>
    tpu.vector_store %arg7[%c13, %c0_31], %65 {strides = array<i32>} : memref<16x128xf32, #tpu.memory_space<vmem>>, vector<3x128xf32>,
    %cst_32 = arith.constant 1.000000e+00 : f32
    %67 = vector.broadcast %cst_32 : f32 to vector<1x128xf32>
    %c0_33 = arith.constant 0 : index
    %c0_34 = arith.constant 0 : index
    %68 = vector.load %arg7[%c0_33, %c0_34] : memref<16x128xf32, #tpu.memory_space<vmem>>, vector<16x128xf32>
    %cst_35 = arith.constant dense<0.000000e+00> : vector<1x16xf32>
    %69 = tpu.matmul %67, %68, %cst_35 {dimension_numbers = #tpu.dot_dimension_numbers<[1], [1], [0], [0], [0, 0, 1, 0], [], []>} : vector<1x128xf32>, vector<16x128xf32>, vector<1x16xf32> -> vector<1x16xf32>
    %cst_36 = arith.constant 0.000000e+00 : f32
    %70 = vector.broadcast %cst_36 : f32 to vector<1x16xf32>
    %71 = arith.maximumf %69, %70 : vector<1x16xf32>
    %72 = math.sqrt %71 : vector<1x16xf32>
    %73 = vector.extract_strided_slice %72 {offsets = [0, 2], sizes = [1, 1], strides = [1, 1]} : vector<1x16xf32> to vector<1x1xf32>
    %74 = vector.extract_strided_slice %72 {offsets = [0, 3], sizes = [1, 1], strides = [1, 1]} : vector<1x16xf32> to vector<1x1xf32>
    %75 = vector.extract_strided_slice %72 {offsets = [0, 12], sizes = [1, 1], strides = [1, 1]} : vector<1x16xf32> to vector<1x1xf32>
    %cst_37 = arith.constant 9.99999968E-21 : f32
    %76 = vector.broadcast %cst_37 : f32 to vector<1x1xf32>
    %77 = arith.cmpf ogt, %73, %76 : vector<1x1xf32>
    %cst_38 = arith.constant 1.000000e+00 : f32
    %78 = vector.broadcast %cst_38 : f32 to vector<1x1xf32>
    %79 = arith.divf %78, %73 : vector<1x1xf32>
    %cst_39 = arith.constant 1.000000e+00 : f32
    %80 = vector.broadcast %cst_39 : f32 to vector<1x1xf32>
    %81 = arith.select %77, %79, %80 : vector<1x1xi1>, vector<1x1xf32>
    %cst_40 = arith.constant 9.99999968E-21 : f32
    %82 = vector.broadcast %cst_40 : f32 to vector<1x1xf32>
    %83 = arith.cmpf ogt, %74, %82 : vector<1x1xf32>
    %cst_41 = arith.constant 1.000000e+00 : f32
    %84 = vector.broadcast %cst_41 : f32 to vector<1x1xf32>
    %85 = arith.divf %84, %74 : vector<1x1xf32>
    %cst_42 = arith.constant 1.000000e+00 : f32
    %86 = vector.broadcast %cst_42 : f32 to vector<1x1xf32>
    %87 = arith.select %83, %85, %86 : vector<1x1xi1>, vector<1x1xf32>
    %cst_43 = arith.constant 9.99999968E-21 : f32
    %88 = vector.broadcast %cst_43 : f32 to vector<1x1xf32>
    %89 = arith.cmpf ogt, %75, %88 : vector<1x1xf32>
    %cst_44 = arith.constant 1.000000e+00 : f32
    %90 = vector.broadcast %cst_44 : f32 to vector<1x1xf32>
    %91 = arith.divf %90, %75 : vector<1x1xf32>
    %cst_45 = arith.constant 1.000000e+00 : f32
    %92 = vector.broadcast %cst_45 : f32 to vector<1x1xf32>
    %93 = arith.select %89, %91, %92 : vector<1x1xi1>, vector<1x1xf32>
    %94 = arith.mulf %87, %81 : vector<1x1xf32>
    %95 = vector.extract_strided_slice %21 {offsets = [0, 0], sizes = [1, 1], strides = [1, 1]} : vector<1x8xf32> to vector<1x1xf32>
    %cst_46 = arith.constant 5.000000e-01 : f32
    %96 = vector.broadcast %cst_46 : f32 to vector<1x1xf32>
    %97 = arith.mulf %96, %95 : vector<1x1xf32>
    %98 = vector.extract_strided_slice %21 {offsets = [0, 1], sizes = [1, 1], strides = [1, 1]} : vector<1x8xf32> to vector<1x1xf32>
    %cst_47 = arith.constant 5.000000e-01 : f32
    %99 = vector.broadcast %cst_47 : f32 to vector<1x1xf32>
    %100 = arith.mulf %99, %98 : vector<1x1xf32>
    %101 = vector.extract_strided_slice %69 {offsets = [0, 0], sizes = [1, 1], strides = [1, 1]} : vector<1x16xf32> to vector<1x1xf32>
    %102 = vector.broadcast %0 : f32 to vector<1x1xf32>
    %103 = arith.mulf %102, %101 : vector<1x1xf32>
    %104 = vector.extract_strided_slice %69 {offsets = [0, 1], sizes = [1, 1], strides = [1, 1]} : vector<1x16xf32> to vector<1x1xf32>
    %105 = vector.broadcast %0 : f32 to vector<1x1xf32>
    %106 = arith.mulf %105, %104 : vector<1x1xf32>
    %107 = arith.addf %97, %103 : vector<1x1xf32>
    %108 = arith.addf %100, %106 : vector<1x1xf32>
    %109 = vector.extract_strided_slice %69 {offsets = [0, 10], sizes = [1, 1], strides = [1, 1]} : vector<1x16xf32> to vector<1x1xf32>
    %110 = arith.mulf %109, %94 : vector<1x1xf32>
    %111 = vector.extract_strided_slice %69 {offsets = [0, 11], sizes = [1, 1], strides = [1, 1]} : vector<1x16xf32> to vector<1x1xf32>
    %112 = arith.mulf %111, %94 : vector<1x1xf32>
    %113 = tpu.iota {dimensions = array<i32: 1>} : vector<1x16xi32>
    %c4_i32 = arith.constant 4 : i32
    %114 = vector.broadcast %c4_i32 : i32 to vector<1x16xi32>
    %115 = arith.cmpi sge, %113, %114 : vector<1x16xi32>
    %c9_i32 = arith.constant 9 : i32
    %116 = vector.broadcast %c9_i32 : i32 to vector<1x16xi32>
    %117 = arith.cmpi sle, %113, %116 : vector<1x16xi32>
    %118 = arith.andi %115, %117 : vector<1x16xi1>
    %cst_48 = arith.constant 0.000000e+00 : f32
    %119 = vector.broadcast %cst_48 : f32 to vector<1x16xf32>
    %120 = arith.select %118, %72, %119 : vector<1x16xi1>, vector<1x16xf32>
    %c1_i32 = arith.constant 1 : i32
    %121 = vector.broadcast %c1_i32 : i32 to vector<1x16xi32>
    %122 = arith.cmpi eq, %113, %121 : vector<1x16xi32>
    %cst_49 = arith.constant 0.000000e+00 : f32
    %123 = vector.shape_cast %108 : vector<1x1xf32> to vector<1x1xf32>
    %124 = vector.broadcast %123 : vector<1x1xf32> to vector<1x16xf32>
    %125 = vector.broadcast %cst_49 : f32 to vector<1x16xf32>
    %126 = arith.select %122, %124, %125 : vector<1x16xi1>, vector<1x16xf32>
    %127 = arith.addf %120, %126 : vector<1x16xf32>
    %c2_i32 = arith.constant 2 : i32
    %128 = vector.broadcast %c2_i32 : i32 to vector<1x16xi32>
    %129 = arith.cmpi eq, %113, %128 : vector<1x16xi32>
    %cst_50 = arith.constant 0.000000e+00 : f32
    %130 = vector.shape_cast %100 : vector<1x1xf32> to vector<1x1xf32>
    %131 = vector.broadcast %130 : vector<1x1xf32> to vector<1x16xf32>
    %132 = vector.broadcast %cst_50 : f32 to vector<1x16xf32>
    %133 = arith.select %129, %131, %132 : vector<1x16xi1>, vector<1x16xf32>
    %134 = arith.addf %127, %133 : vector<1x16xf32>
    %c3_i32 = arith.constant 3 : i32
    %135 = vector.broadcast %c3_i32 : i32 to vector<1x16xi32>
    %136 = arith.cmpi eq, %113, %135 : vector<1x16xi32>
    %cst_51 = arith.constant 0.000000e+00 : f32
    %137 = vector.shape_cast %106 : vector<1x1xf32> to vector<1x1xf32>
    %138 = vector.broadcast %137 : vector<1x1xf32> to vector<1x16xf32>
    %139 = vector.broadcast %cst_51 : f32 to vector<1x16xf32>
    %140 = arith.select %136, %138, %139 : vector<1x16xi1>, vector<1x16xf32>
    %141 = arith.addf %134, %140 : vector<1x16xf32>
    %c1_i32_52 = arith.constant 1 : i32
    %142 = vector.broadcast %c1_i32_52 : i32 to vector<1x16xi32>
    %143 = arith.cmpi eq, %113, %142 : vector<1x16xi32>
    %cst_53 = arith.constant 0.000000e+00 : f32
    %144 = vector.shape_cast %107 : vector<1x1xf32> to vector<1x1xf32>
    %145 = vector.broadcast %144 : vector<1x1xf32> to vector<1x16xf32>
    %146 = vector.broadcast %cst_53 : f32 to vector<1x16xf32>
    %147 = arith.select %143, %145, %146 : vector<1x16xi1>, vector<1x16xf32>
    %c2_i32_54 = arith.constant 2 : i32
    %148 = vector.broadcast %c2_i32_54 : i32 to vector<1x16xi32>
    %149 = arith.cmpi eq, %113, %148 : vector<1x16xi32>
    %cst_55 = arith.constant 0.000000e+00 : f32
    %150 = vector.shape_cast %97 : vector<1x1xf32> to vector<1x1xf32>
    %151 = vector.broadcast %150 : vector<1x1xf32> to vector<1x16xf32>
    %152 = vector.broadcast %cst_55 : f32 to vector<1x16xf32>
    %153 = arith.select %149, %151, %152 : vector<1x16xi1>, vector<1x16xf32>
    %154 = arith.addf %147, %153 : vector<1x16xf32>
    %c3_i32_56 = arith.constant 3 : i32
    %155 = vector.broadcast %c3_i32_56 : i32 to vector<1x16xi32>
    %156 = arith.cmpi eq, %113, %155 : vector<1x16xi32>
    %cst_57 = arith.constant 0.000000e+00 : f32
    %157 = vector.shape_cast %103 : vector<1x1xf32> to vector<1x1xf32>
    %158 = vector.broadcast %157 : vector<1x1xf32> to vector<1x16xf32>
    %159 = vector.broadcast %cst_57 : f32 to vector<1x16xf32>
    %160 = arith.select %156, %158, %159 : vector<1x16xi1>, vector<1x16xf32>
    %161 = arith.addf %154, %160 : vector<1x16xf32>
    %cst_58 = arith.constant 1.000000e+00 : f32
    %162 = vector.broadcast %cst_58 : f32 to vector<1x16xf32>
    %163 = arith.addf %162, %141 : vector<1x16xf32>
    %164 = math.log %163 : vector<1x16xf32>
    %cst_59 = arith.constant 1.000000e+00 : f32
    %165 = vector.broadcast %cst_59 : f32 to vector<1x16xf32>
    %166 = arith.addf %165, %161 : vector<1x16xf32>
    %167 = math.log %166 : vector<1x16xf32>
    %168 = arith.subf %164, %167 : vector<1x16xf32>
    %c0_i32 = arith.constant 0 : i32
    %169 = vector.broadcast %c0_i32 : i32 to vector<1x16xi32>
    %170 = arith.cmpi eq, %113, %169 : vector<1x16xi32>
    %cst_60 = arith.constant 0.000000e+00 : f32
    %171 = vector.broadcast %0 : f32 to vector<1x16xf32>
    %172 = vector.broadcast %cst_60 : f32 to vector<1x16xf32>
    %173 = arith.select %170, %171, %172 : vector<1x16xi1>, vector<1x16xf32>
    %174 = arith.addf %168, %173 : vector<1x16xf32>
    %c10_i32 = arith.constant 10 : i32
    %175 = vector.broadcast %c10_i32 : i32 to vector<1x16xi32>
    %176 = arith.cmpi eq, %113, %175 : vector<1x16xi32>
    %cst_61 = arith.constant 0.000000e+00 : f32
    %177 = vector.shape_cast %110 : vector<1x1xf32> to vector<1x1xf32>
    %178 = vector.broadcast %177 : vector<1x1xf32> to vector<1x16xf32>
    %179 = vector.broadcast %cst_61 : f32 to vector<1x16xf32>
    %180 = arith.select %176, %178, %179 : vector<1x16xi1>, vector<1x16xf32>
    %181 = arith.addf %174, %180 : vector<1x16xf32>
    %c11_i32 = arith.constant 11 : i32
    %182 = vector.broadcast %c11_i32 : i32 to vector<1x16xi32>
    %183 = arith.cmpi eq, %113, %182 : vector<1x16xi32>
    %cst_62 = arith.constant 0.000000e+00 : f32
    %184 = vector.shape_cast %112 : vector<1x1xf32> to vector<1x1xf32>
    %185 = vector.broadcast %184 : vector<1x1xf32> to vector<1x16xf32>
    %186 = vector.broadcast %cst_62 : f32 to vector<1x16xf32>
    %187 = arith.select %183, %185, %186 : vector<1x16xi1>, vector<1x16xf32>
    %188 = arith.addf %181, %187 : vector<1x16xf32>
    %c0_63 = arith.constant 0 : index
    %c0_64 = arith.constant 0 : index
    %189 = vector.load %arg4[%c0_63, %c0_64] : memref<128x32xf32, #tpu.memory_space<vmem>>, vector<16x32xf32>
    %cst_65 = arith.constant dense<0.000000e+00> : vector<1x32xf32>
    %190 = tpu.matmul %188, %189, %cst_65 {dimension_numbers = #tpu.dot_dimension_numbers<[1], [0], [0], [1], [0, 0, 1, 1], [], []>} : vector<1x16xf32>, vector<16x32xf32>, vector<1x32xf32> -> vector<1x32xf32>
    %cst_66 = arith.constant 0.000000e+00 : f32
    %191 = vector.broadcast %cst_66 : f32 to vector<1x32xf32>
    %192 = arith.maximumf %190, %191 : vector<1x32xf32>
    %c32 = arith.constant 32 : index
    %c0_67 = arith.constant 0 : index
    %193 = vector.load %arg4[%c32, %c0_67] : memref<128x32xf32, #tpu.memory_space<vmem>>, vector<32x32xf32>
    %cst_68 = arith.constant dense<0.000000e+00> : vector<1x32xf32>
    %194 = tpu.matmul %192, %193, %cst_68 {dimension_numbers = #tpu.dot_dimension_numbers<[1], [0], [0], [1], [0, 0, 1, 1], [], []>} : vector<1x32xf32>, vector<32x32xf32>, vector<1x32xf32> -> vector<1x32xf32>
    %cst_69 = arith.constant 0.000000e+00 : f32
    %195 = vector.broadcast %cst_69 : f32 to vector<1x32xf32>
    %196 = arith.maximumf %194, %195 : vector<1x32xf32>
    %c64 = arith.constant 64 : index
    %c0_70 = arith.constant 0 : index
    %197 = vector.load %arg4[%c64, %c0_70] : memref<128x32xf32, #tpu.memory_space<vmem>>, vector<32x32xf32>
    %cst_71 = arith.constant dense<0.000000e+00> : vector<1x32xf32>
    %198 = tpu.matmul %196, %197, %cst_71 {dimension_numbers = #tpu.dot_dimension_numbers<[1], [0], [0], [1], [0, 0, 1, 1], [], []>} : vector<1x32xf32>, vector<32x32xf32>, vector<1x32xf32> -> vector<1x32xf32>
    %cst_72 = arith.constant 0.000000e+00 : f32
    %199 = vector.broadcast %cst_72 : f32 to vector<1x32xf32>
    %200 = arith.maximumf %198, %199 : vector<1x32xf32>
    %c96 = arith.constant 96 : index
    %c0_73 = arith.constant 0 : index
    %201 = vector.load %arg4[%c96, %c0_73] : memref<128x32xf32, #tpu.memory_space<vmem>>, vector<32x32xf32>
    %cst_74 = arith.constant dense<0.000000e+00> : vector<1x32xf32>
    %202 = tpu.matmul %200, %201, %cst_74 {dimension_numbers = #tpu.dot_dimension_numbers<[1], [0], [0], [1], [0, 0, 1, 1], [], []>} : vector<1x32xf32>, vector<32x32xf32>, vector<1x32xf32> -> vector<1x32xf32>
    %203 = vector.broadcast %87 : vector<1x1xf32> to vector<1x128xf32>
    %204 = arith.mulf %18, %203 : vector<1x128xf32>
    %205 = vector.broadcast %81 : vector<1x1xf32> to vector<1x128xf32>
    %206 = arith.mulf %13, %205 : vector<1x128xf32>
    %207 = vector.broadcast %93 : vector<1x1xf32> to vector<1x128xf32>
    %208 = arith.mulf %37, %207 : vector<1x128xf32>
    %209 = arith.mulf %204, %10 : vector<1x128xf32>
    %210 = arith.mulf %204, %12 : vector<1x128xf32>
    %211 = arith.mulf %208, %10 : vector<1x128xf32>
    %212 = arith.mulf %208, %12 : vector<1x128xf32>
    %213 = arith.mulf %206, %10 : vector<1x128xf32>
    %214 = arith.mulf %206, %12 : vector<1x128xf32>
    %c0_75 = arith.constant 0 : index
    %c0_76 = arith.constant 0 : index
    %215 = vector.load %arg7[%c0_75, %c0_76] : memref<16x128xf32, #tpu.memory_space<vmem>>, vector<1x128xf32>
    tpu.vector_store %arg7[%c0_75, %c0_76], %209 {strides = array<i32>} : memref<16x128xf32, #tpu.memory_space<vmem>>, vector<1x128xf32>,
    %c1_77 = arith.constant 1 : index
    %c0_78 = arith.constant 0 : index
    %216 = vector.load %arg7[%c1_77, %c0_78] : memref<16x128xf32, #tpu.memory_space<vmem>>, vector<1x128xf32>
    tpu.vector_store %arg7[%c1_77, %c0_78], %210 {strides = array<i32>} : memref<16x128xf32, #tpu.memory_space<vmem>>, vector<1x128xf32>,
    %c2_79 = arith.constant 2 : index
    %c0_80 = arith.constant 0 : index
    %217 = vector.load %arg7[%c2_79, %c0_80] : memref<16x128xf32, #tpu.memory_space<vmem>>, vector<1x128xf32>
    tpu.vector_store %arg7[%c2_79, %c0_80], %211 {strides = array<i32>} : memref<16x128xf32, #tpu.memory_space<vmem>>, vector<1x128xf32>,
    %c3_81 = arith.constant 3 : index
    %c0_82 = arith.constant 0 : index
    %218 = vector.load %arg7[%c3_81, %c0_82] : memref<16x128xf32, #tpu.memory_space<vmem>>, vector<1x128xf32>
    tpu.vector_store %arg7[%c3_81, %c0_82], %212 {strides = array<i32>} : memref<16x128xf32, #tpu.memory_space<vmem>>, vector<1x128xf32>,
    %c4_83 = arith.constant 4 : index
    %c0_84 = arith.constant 0 : index
    %219 = vector.load %arg7[%c4_83, %c0_84] : memref<16x128xf32, #tpu.memory_space<vmem>>, vector<1x128xf32>
    tpu.vector_store %arg7[%c4_83, %c0_84], %213 {strides = array<i32>} : memref<16x128xf32, #tpu.memory_space<vmem>>, vector<1x128xf32>,
    %c5_85 = arith.constant 5 : index
    %c0_86 = arith.constant 0 : index
    %220 = vector.load %arg7[%c5_85, %c0_86] : memref<16x128xf32, #tpu.memory_space<vmem>>, vector<1x128xf32>
    tpu.vector_store %arg7[%c5_85, %c0_86], %214 {strides = array<i32>} : memref<16x128xf32, #tpu.memory_space<vmem>>, vector<1x128xf32>,
    %221 = arith.mulf %210, %214 : vector<1x128xf32>
    %c6_87 = arith.constant 6 : index
    %c0_88 = arith.constant 0 : index
    %222 = vector.load %arg7[%c6_87, %c0_88] : memref<16x128xf32, #tpu.memory_space<vmem>>, vector<1x128xf32>
    tpu.vector_store %arg7[%c6_87, %c0_88], %221 {strides = array<i32>} : memref<16x128xf32, #tpu.memory_space<vmem>>, vector<1x128xf32>,
    %223 = arith.mulf %209, %213 : vector<1x128xf32>
    %c7_89 = arith.constant 7 : index
    %c0_90 = arith.constant 0 : index
    %224 = vector.load %arg7[%c7_89, %c0_90] : memref<16x128xf32, #tpu.memory_space<vmem>>, vector<1x128xf32>
    tpu.vector_store %arg7[%c7_89, %c0_90], %223 {strides = array<i32>} : memref<16x128xf32, #tpu.memory_space<vmem>>, vector<1x128xf32>,
    %c0_91 = arith.constant 0 : index
    %c0_92 = arith.constant 0 : index
    %225 = vector.load %arg7[%c0_91, %c0_92] : memref<16x128xf32, #tpu.memory_space<vmem>>, vector<8x128xf32>
    %c0_93 = arith.constant 0 : index
    %c0_94 = arith.constant 0 : index
    %226 = vector.load %arg5[%c0_93, %c0_94] : memref<128x32xf32, #tpu.memory_space<vmem>>, vector<32x32xf32>
    %227 = vector.extract_strided_slice %226 {offsets = [0, 0], sizes = [32, 8], strides = [1, 1]} : vector<32x32xf32> to vector<32x8xf32>
    %228 = vector.extract_strided_slice %202 {offsets = [0, 0], sizes = [1, 8], strides = [1, 1]} : vector<1x32xf32> to vector<1x8xf32>
    %229 = vector.broadcast %228 : vector<1x8xf32> to vector<32x8xf32>
    %230 = arith.mulf %227, %229 : vector<32x8xf32>
    %cst_95 = arith.constant dense<0.000000e+00> : vector<32x128xf32>
    %231 = tpu.matmul %230, %225, %cst_95 {dimension_numbers = #tpu.dot_dimension_numbers<[1], [0], [0], [1], [0, 0, 1, 1], [], []>} : vector<32x8xf32>, vector<8x128xf32>, vector<32x128xf32> -> vector<32x128xf32>
    %cst_96 = arith.constant 0.000000e+00 : f32
    %232 = vector.broadcast %cst_96 : f32 to vector<32x128xf32>
    %233 = arith.maximumf %231, %232 : vector<32x128xf32>
    %c32_97 = arith.constant 32 : index
    %c0_98 = arith.constant 0 : index
    %234 = vector.load %arg5[%c32_97, %c0_98] : memref<128x32xf32, #tpu.memory_space<vmem>>, vector<32x32xf32>
    %cst_99 = arith.constant dense<0.000000e+00> : vector<32x128xf32>
    %235 = tpu.matmul %234, %233, %cst_99 {dimension_numbers = #tpu.dot_dimension_numbers<[1], [0], [0], [1], [0, 0, 1, 1], [], []>} : vector<32x32xf32>, vector<32x128xf32>, vector<32x128xf32> -> vector<32x128xf32>
    %cst_100 = arith.constant 0.000000e+00 : f32
    %236 = vector.broadcast %cst_100 : f32 to vector<32x128xf32>
    %237 = arith.maximumf %235, %236 : vector<32x128xf32>
    %c64_101 = arith.constant 64 : index
    %c0_102 = arith.constant 0 : index
    %238 = vector.load %arg5[%c64_101, %c0_102] : memref<128x32xf32, #tpu.memory_space<vmem>>, vector<32x32xf32>
    %cst_103 = arith.constant dense<0.000000e+00> : vector<32x128xf32>
    %239 = tpu.matmul %238, %237, %cst_103 {dimension_numbers = #tpu.dot_dimension_numbers<[1], [0], [0], [1], [0, 0, 1, 1], [], []>} : vector<32x32xf32>, vector<32x128xf32>, vector<32x128xf32> -> vector<32x128xf32>
    %cst_104 = arith.constant 0.000000e+00 : f32
    %240 = vector.broadcast %cst_104 : f32 to vector<32x128xf32>
    %241 = arith.maximumf %239, %240 : vector<32x128xf32>
    %c96_105 = arith.constant 96 : index
    %c0_106 = arith.constant 0 : index
    %242 = vector.load %arg5[%c96_105, %c0_106] : memref<128x32xf32, #tpu.memory_space<vmem>>, vector<32x32xf32>
    %cst_107 = arith.constant dense<0.000000e+00> : vector<32x128xf32>
    %243 = tpu.matmul %242, %241, %cst_107 {dimension_numbers = #tpu.dot_dimension_numbers<[1], [0], [0], [1], [0, 0, 1, 1], [], []>} : vector<32x32xf32>, vector<32x128xf32>, vector<32x128xf32> -> vector<32x128xf32>
    %244 = vector.extract_strided_slice %243 {offsets = [0, 0], sizes = [1, 128], strides = [1, 1]} : vector<32x128xf32> to vector<1x128xf32>
    %245 = arith.mulf %244, %10 : vector<1x128xf32>
    %246 = vector.extract_strided_slice %243 {offsets = [1, 0], sizes = [1, 128], strides = [1, 1]} : vector<32x128xf32> to vector<1x128xf32>
    %247 = arith.mulf %246, %12 : vector<1x128xf32>
    %248 = arith.subf %245, %18 : vector<1x128xf32>
    %249 = vector.broadcast %73 : vector<1x1xf32> to vector<1x128xf32>
    %250 = arith.mulf %249, %247 : vector<1x128xf32>
    %251 = arith.addf %248, %250 : vector<1x128xf32>
    %252 = vector.broadcast %1 : f32 to vector<1x128xf32>
    %253 = arith.divf %251, %252 : vector<1x128xf32>
    %254 = arith.addf %5, %253 : vector<1x128xf32>
    %cst_108 = arith.constant 0.000000e+00 : f32
    %255 = vector.broadcast %cst_108 : f32 to vector<1x128xf32>
    %256 = arith.cmpf oge, %254, %255 : vector<1x128xf32>
    %cst_109 = arith.constant 1.000000e+00 : f32
    %cst_110 = arith.constant -1.000000e+00 : f32
    %257 = vector.broadcast %cst_109 : f32 to vector<1x128xf32>
    %258 = vector.broadcast %cst_110 : f32 to vector<1x128xf32>
    %259 = arith.select %256, %257, %258 : vector<1x128xi1>, vector<1x128xf32>
    %260 = math.absf %254 : vector<1x128xf32>
    %261 = vector.broadcast %22 : f32 to vector<1x128xf32>
    %262 = arith.subf %260, %261 : vector<1x128xf32>
    %cst_111 = arith.constant 0.000000e+00 : f32
    %263 = vector.broadcast %cst_111 : f32 to vector<1x128xf32>
    %264 = arith.maximumf %262, %263 : vector<1x128xf32>
    %265 = arith.mulf %259, %264 : vector<1x128xf32>
    %c0_112 = arith.constant 0 : index
    %c0_113 = arith.constant 0 : index
    %266 = vector.load %arg6[%c0_112, %c0_113] : memref<1x128xf32, #tpu.memory_space<vmem>>, vector<1x128xf32>
    tpu.vector_store %arg6[%c0_112, %c0_113], %265 {strides = array<i32>} : memref<1x128xf32, #tpu.memory_space<vmem>>, vector<1x128xf32>,
    return
  }
}

</mosaic_0001>

<llo_original>
// kernel: tpu_custom_call.1
$region0: #{tpu_custom_call.1}
  #allocation0 [shape = 'u32[]', space=smem, size = 0x4, offset = 0x4, fixed_abs, tag = 'smem constant byte address 0x4 - core index']
  #allocation1 [shape = 'u32[144,128]{1,0:T(1,128)}', space=vmem, size = 0x12000, scoped, tag = 'internal scratch']
  #allocation2 [shape = 'f32[16,128]{1,0:T(8,128)}', space=vmem, size = 0x2000, scoped, tag = 'scratch operand']
  %s0 = inlined_call_operand.vmem [shape: f32[2], index: 0, kind: input, shape index: {}]
  %s1 = inlined_call_operand.vmem [shape: f32[24,128], index: 1, kind: input, shape index: {}]
  %s2 = inlined_call_operand.vmem [shape: f32[24,1], index: 2, kind: input, shape index: {}]
  %s3 = inlined_call_operand.vmem [shape: f32[8,128], index: 3, kind: input, shape index: {}]
  %s4 = inlined_call_operand.vmem [shape: f32[128,32], index: 4, kind: input, shape index: {}]
  %s5 = inlined_call_operand.vmem [shape: f32[128,32], index: 5, kind: input, shape index: {}]
  %s6 = inlined_call_operand.hbm [shape: f32[1,128], index: 6, kind: output, shape index: {}]
  %s7 = sld [smem:[#allocation0]]
  $region38: #{tpu_custom_call.1} parent=0
    _
  %s9 = ssub.s32 1, %s7
  %s10 = scalar_select 0, %s9, %s7
  $region1: #{tpu_custom_call.1} parent=0
    #allocation3 [shape = 'u8[512]{0}', space=smem, size = 0x200, scoped, tag = 'input window, operand 0, single buffered']
    #allocation4 [shape = 's32[1]{0}', space=sflag, size = 0x4, scoped, tag = 'scoped memory for tpu_custom_call.1']
    #allocation5 [shape = 's32[1]{0}', space=sflag, size = 0x4, scoped, tag = 'scoped memory for tpu_custom_call.1']
    #allocation6 [shape = 'u8[512]{0}', space=vmem, size = 0x400, scoped, tag = 'output window, operand 0, single buffered']
    %11 = vsyncpa [#allocation5], 0
    %12 = vsyncpa [#allocation4], 0
    // Predicated region
    $region2: #{tpu_custom_call.1} parent=1 // pred_check
      _
    $region3: #{tpu_custom_call.1} parent=1 // pred_check_branch
      %14 = sbr.rel (0) target = $region5
    $region4: #{tpu_custom_call.1} parent=1 // pred_region
      %s16 = ssub.s32 16, 16
      %17 = vsyncadd [#allocation5], %s16
      %s19 = sshll.u32 %s0, 4
      %s20 = int_to_ptr.vmem [resolvable:$true] %s19
      %22 = dma.vmem_to_smem %s20, 16, [#allocation3], [#allocation5]
    $region5: #{tpu_custom_call.1} parent=1 // pred_fallthru
      _
    // Predicated region
    $region6: #{tpu_custom_call.1} parent=1 // pred_check
      _
    $region7: #{tpu_custom_call.1} parent=1 // pred_check_branch
      %24 = sbr.rel (0) target = $region9
    $region8: #{tpu_custom_call.1} parent=1 // pred_region
      _
    $region9: #{tpu_custom_call.1} parent=1 // pred_fallthru
      _
    // Predicated region
    $region10: #{tpu_custom_call.1} parent=1 // pred_check
      _
    $region11: #{tpu_custom_call.1} parent=1 // pred_check_branch
      %26 = sbr.rel (0) target = $region13
    $region12: #{tpu_custom_call.1} parent=1 // pred_region
      _
    $region13: #{tpu_custom_call.1} parent=1 // pred_fallthru
      _
    // Predicated region
    $region14: #{tpu_custom_call.1} parent=1 // pred_check
      _
    $region15: #{tpu_custom_call.1} parent=1 // pred_check_branch
      %28 = sbr.rel (0) target = $region17
    $region16: #{tpu_custom_call.1} parent=1 // pred_region
      _
    $region17: #{tpu_custom_call.1} parent=1 // pred_fallthru
      _
    // Predicated region
    $region18: #{tpu_custom_call.1} parent=1 // pred_check
      _
    $region19: #{tpu_custom_call.1} parent=1 // pred_check_branch
      %30 = sbr.rel (0) target = $region21
    $region20: #{tpu_custom_call.1} parent=1 // pred_region
      _
    $region21: #{tpu_custom_call.1} parent=1 // pred_fallthru
      _
    // Predicated region
    $region22: #{tpu_custom_call.1} parent=1 // pred_check
      _
    $region23: #{tpu_custom_call.1} parent=1 // pred_check_branch
      %32 = sbr.rel (0) target = $region25
    $region24: #{tpu_custom_call.1} parent=1 // pred_region
      _
    $region25: #{tpu_custom_call.1} parent=1 // pred_fallthru
      _
    // Predicated region
    $region26: #{tpu_custom_call.1} parent=1 // pred_check
      _
    $region27: #{tpu_custom_call.1} parent=1 // pred_check_branch
      %34 = sbr.rel (0) target = $region29
    $region28: #{tpu_custom_call.1} parent=1 // pred_region
      %35 = dma.done [#allocation5], 16
    $region29: #{tpu_custom_call.1} parent=1 // pred_fallthru
      _
    %36 = sfence
    %s37 = sld [smem:[#allocation3]]
    %s38 = sld [smem:[#allocation3 + $0x1]]
    %v39 = vld [vmem:[%s1] sm:$0xff]
    %v40 = vld [vmem:[%s1 + $0x8] sm:$0xff]
    %v41 = vld [vmem:[%s1 + $0x10] sm:$0xff]
    %v42 = vld [vmem:[%s2] sm:$0xff]
    %v43 = vld [vmem:[%s2 + $0x8] sm:$0xff]
    %v44 = vld [vmem:[%s2 + $0x10] sm:$0xff]
    %v45 = vld [vmem:[%s3] sm:$0xff]
    %vm46 = vcmp.eq.f32.partialorder %v45, 0.0
    %v47 = vsel %vm46, 1, 0
    %v48 = vcvt.s32.f32 %v47
    %v49 = vsub.f32 1.0, %v48
    %v51 = vrot.slane %v45, 1
    %v53 = vsub.f32 %v45, %v51
    %54 = vmatprep.subr.mxu0 0.0
    %55 = vmatpush1.xpose.msra.mxu0 %v45
    %56 = vmatprep.subr.mxu0 0.0
    %57 = vmatpush1.xpose.msra.mxu0 0.0
    %58 = vmatprep.subr.mxu0 0.0
    %59 = vmatpush1.xpose.msra.mxu0 0.0
    %60 = vmatprep.subr.mxu0 0.0
    %61 = vmatpush1.xpose.msra.mxu0 0.0
    %62 = vmatprep.subr.mxu0 0.0
    %63 = vmatpush1.xpose.msra.mxu0 0.0
    %64 = vmatprep.subr.mxu0 0.0
    %65 = vmatpush1.xpose.msra.mxu0 0.0
    %66 = vmatprep.subr.mxu0 0.0
    %67 = vmatpush1.xpose.msra.mxu0 0.0
    %68 = vmatprep.subr.mxu0 0.0
    %69 = vmatpush1.xpose.msra.mxu0 0.0
    %70 = vmatprep.subr.mxu0 0.0
    %71 = vmatpush1.xpose.msra.mxu0 0.0
    %72 = vmatprep.subr.mxu0 0.0
    %73 = vmatpush1.xpose.msra.mxu0 0.0
    %74 = vmatprep.subr.mxu0 0.0
    %75 = vmatpush1.xpose.msra.mxu0 0.0
    %76 = vmatprep.subr.mxu0 0.0
    %77 = vmatpush1.xpose.msra.mxu0 0.0
    %78 = vmatprep.subr.mxu0 0.0
    %79 = vmatpush1.xpose.msra.mxu0 0.0
    %80 = vmatprep.subr.mxu0 0.0
    %81 = vmatpush1.xpose.msra.mxu0 0.0
    %82 = vmatprep.subr.mxu0 0.0
    %83 = vmatpush1.xpose.msra.mxu0 0.0
    %84 = vmatprep.subr.mxu0 0.0
    %85 = vmatpush1.xpose.msra.mxu0 0.0
    %86 = vmatprep.subr.mxu0 0.0
    %87 = vmatpush1.xpose.msra.mxu0 0.0
    %88 = vmatprep.subr.mxu0 0.0
    %89 = vmatpush1.xpose.msra.mxu0 0.0
    %90 = vmatprep.subr.mxu0 0.0
    %91 = vmatpush1.xpose.msra.mxu0 0.0
    %92 = vmatprep.subr.mxu0 0.0
    %93 = vmatpush1.xpose.msra.mxu0 0.0
    %94 = vmatprep.subr.mxu0 0.0
    %95 = vmatpush1.xpose.msra.mxu0 0.0
    %96 = vmatprep.subr.mxu0 0.0
    %97 = vmatpush1.xpose.msra.mxu0 0.0
    %98 = vmatprep.subr.mxu0 0.0
    %99 = vmatpush1.xpose.msra.mxu0 0.0
    %100 = vmatprep.subr.mxu0 0.0
    %101 = vmatpush1.xpose.msra.mxu0 0.0
    %102 = vmatprep.subr.mxu0 0.0
    %103 = vmatpush1.xpose.msra.mxu0 0.0
    %104 = vmatprep.subr.mxu0 0.0
    %105 = vmatpush1.xpose.msra.mxu0 0.0
    %106 = vmatprep.subr.mxu0 0.0
    %107 = vmatpush1.xpose.msra.mxu0 0.0
    %108 = vmatprep.subr.mxu0 0.0
    %109 = vmatpush1.xpose.msra.mxu0 0.0
    %110 = vmatprep.subr.mxu0 0.0
    %111 = vmatpush1.xpose.msra.mxu0 0.0
    %112 = vmatprep.subr.mxu0 0.0
    %113 = vmatpush1.xpose.msra.mxu0 0.0
    %114 = vmatprep.subr.mxu0 0.0
    %115 = vmatpush1.xpose.msra.mxu0 0.0
    %116 = vmatprep.subr.mxu0 0.0
    %117 = vmatpush1.xpose.msra.mxu0 0.0
    %118 = vmatprep.mubr.f32.mxu0 0.0
    %119 = vmatmul.mubr.f32.gmra.mrb[0].mxu0 %v39
    %v120 = vpop.f32.mrb[0].mxu0
    %v121 = vadd.f32 0.0, %v120
    %v122 = vpop.f32.mrb[0].mxu0
    %123 = vmatprep.mubr.f32.mxu0 0.0
    %124 = vmatmul.mubr.f32.gmra.mrb[0].mxu0 %v40
    %v125 = vpop.f32.mrb[0].mxu0
    %v126 = vadd.f32 0.0, %v125
    %v127 = vpop.f32.mrb[0].mxu0
    %128 = vmatprep.mubr.f32.mxu0 0.0
    %129 = vmatmul.mubr.f32.gmra.mrb[0].mxu0 %v41
    %v130 = vpop.f32.mrb[0].mxu0
    %v131 = vadd.f32 0.0, %v130
    %v132 = vpop.f32.mrb[0].mxu0
    %133 = vdwg.mxu0
    %135 = vset.pattern.permute.xlu0 0
    %136 = vperm.xlu0 %135, %v42
    %v137 = vpop.permute.xlu0 %136
    %140 = vset.pattern.permute.xlu0 0
    %141 = vperm.xlu0 %140, %v43
    %v142 = vpop.permute.xlu0 %141
    %145 = vset.pattern.permute.xlu0 0
    %146 = vperm.xlu0 %145, %v44
    %v147 = vpop.permute.xlu0 %146
    %v149 = vsub.f32 %v121, %v137
    %v150 = vsub.f32 %v126, %v142
    %v151 = vsub.f32 %v131, %v147
    %152 = vxpose.xlu0.b32.start [1/16] %v149, 128
    %153 = vxpose.xlu0.b32.cont [2/16] %v150, 128
    %154 = vxpose.xlu0.b32.cont [3/16] %v151, 128
    %155 = vxpose.xlu0.b32.cont [4/16] 0.0, 128
    %156 = vxpose.xlu0.b32.cont [5/16] 0.0, 128
    %157 = vxpose.xlu0.b32.cont [6/16] 0.0, 128
    %158 = vxpose.xlu0.b32.cont [7/16] 0.0, 128
    %159 = vxpose.xlu0.b32.cont [8/16] 0.0, 128
    %160 = vxpose.xlu0.b32.cont [9/16] 0.0, 128
    %161 = vxpose.xlu0.b32.cont [10/16] 0.0, 128
    %162 = vxpose.xlu0.b32.cont [11/16] 0.0, 128
    %163 = vxpose.xlu0.b32.cont [12/16] 0.0, 128
    %164 = vxpose.xlu0.b32.cont [13/16] 0.0, 128
    %165 = vxpose.xlu0.b32.cont [14/16] 0.0, 128
    %166 = vxpose.xlu0.b32.cont [15/16] 0.0, 128
    %167 = vxpose.xlu0.b32.end [16/16] 0.0, 128
    %v168 = vpop.trf.xlu0
    %v169 = vpop.trf.xlu0
    %v170 = vpop.trf.xlu0
    %v171 = vpop.trf.xlu0
    %v172 = vpop.trf.xlu0
    %v173 = vpop.trf.xlu0
    %v174 = vpop.trf.xlu0
    %v175 = vpop.trf.xlu0
    %v176 = vpop.trf.xlu0
    %v177 = vpop.trf.xlu0
    %v178 = vpop.trf.xlu0
    %v179 = vpop.trf.xlu0
    %v180 = vpop.trf.xlu0
    %v181 = vpop.trf.xlu0
    %v182 = vpop.trf.xlu0
    %v183 = vpop.trf.xlu0
    %vm184 = vcmask 195584
    %v186 = vsel %vm184, %v168, 0
    %188 = vmatprep.subr.mxu0 0.0
    %189 = vmatpush1.msra.mxu0 %v39
    %190 = vmatprep.subr.mxu0 0.0
    %191 = vmatpush1.msra.mxu0 %v40
    %192 = vmatprep.subr.mxu0 0.0
    %193 = vmatpush1.msra.mxu0 %v41
    %194 = vmatprep.subr.mxu0 0.0
    %195 = vmatpush1.msra.mxu0 0.0
    %196 = vmatprep.subr.mxu0 0.0
    %197 = vmatpush1.msra.mxu0 0.0
    %198 = vmatprep.subr.mxu0 0.0
    %199 = vmatpush1.msra.mxu0 0.0
    %200 = vmatprep.subr.mxu0 0.0
    %201 = vmatpush1.msra.mxu0 0.0
    %202 = vmatprep.subr.mxu0 0.0
    %203 = vmatpush1.msra.mxu0 0.0
    %204 = vmatprep.subr.mxu0 0.0
    %205 = vmatpush1.msra.mxu0 0.0
    %206 = vmatprep.subr.mxu0 0.0
    %207 = vmatpush1.msra.mxu0 0.0
    %208 = vmatprep.subr.mxu0 0.0
    %209 = vmatpush1.msra.mxu0 0.0
    %210 = vmatprep.subr.mxu0 0.0
    %211 = vmatpush1.msra.mxu0 0.0
    %212 = vmatprep.subr.mxu0 0.0
    %213 = vmatpush1.msra.mxu0 0.0
    %214 = vmatprep.subr.mxu0 0.0
    %215 = vmatpush1.msra.mxu0 0.0
    %216 = vmatprep.subr.mxu0 0.0
    %217 = vmatpush1.msra.mxu0 0.0
    %218 = vmatprep.subr.mxu0 0.0
    %219 = vmatpush1.msra.mxu0 0.0
    %220 = vmatprep.subr.mxu0 0.0
    %221 = vmatpush1.msra.mxu0 0.0
    %222 = vmatprep.subr.mxu0 0.0
    %223 = vmatpush1.msra.mxu0 0.0
    %224 = vmatprep.subr.mxu0 0.0
    %225 = vmatpush1.msra.mxu0 0.0
    %226 = vmatprep.subr.mxu0 0.0
    %227 = vmatpush1.msra.mxu0 0.0
    %228 = vmatprep.subr.mxu0 0.0
    %229 = vmatpush1.msra.mxu0 0.0
    %230 = vmatprep.subr.mxu0 0.0
    %231 = vmatpush1.msra.mxu0 0.0
    %232 = vmatprep.subr.mxu0 0.0
    %233 = vmatpush1.msra.mxu0 0.0
    %234 = vmatprep.subr.mxu0 0.0
    %235 = vmatpush1.msra.mxu0 0.0
    %236 = vmatprep.subr.mxu0 0.0
    %237 = vmatpush1.msra.mxu0 0.0
    %238 = vmatprep.subr.mxu0 0.0
    %239 = vmatpush1.msra.mxu0 0.0
    %240 = vmatprep.subr.mxu0 0.0
    %241 = vmatpush1.msra.mxu0 0.0
    %242 = vmatprep.subr.mxu0 0.0
    %243 = vmatpush1.msra.mxu0 0.0
    %244 = vmatprep.subr.mxu0 0.0
    %245 = vmatpush1.msra.mxu0 0.0
    %246 = vmatprep.subr.mxu0 0.0
    %247 = vmatpush1.msra.mxu0 0.0
    %248 = vmatprep.subr.mxu0 0.0
    %249 = vmatpush1.msra.mxu0 0.0
    %250 = vmatprep.subr.mxu0 0.0
    %251 = vmatpush1.msra.mxu0 0.0
    %252 = vmatprep.mubr.f32.mxu0 0.0
    %253 = vmatmul.mubr.f32.gmra.mrb[0].mxu0 %v186
    %v254 = vpop.f32.mrb[0].mxu0
    %v255 = vadd.f32 0.0, %v254
    %v256 = vpop.f32.mrb[0].mxu0
    %257 = vdwg.mxu0
    %v258 = vmul.f32 %v149, %v149
    %v259 = vmul.f32 %v150, %v150
    %v260 = vmul.f32 %v151, %v151
    %v262 = vsel %vm184, 1.0, 0
    %264 = vmatprep.subr.mxu0 0.0
    %265 = vmatpush1.msra.mxu0 %v258
    %266 = vmatprep.subr.mxu0 0.0
    %267 = vmatpush1.msra.mxu0 %v259
    %268 = vmatprep.subr.mxu0 0.0
    %269 = vmatpush1.msra.mxu0 %v260
    %270 = vmatprep.subr.mxu0 0.0
    %271 = vmatpush1.msra.mxu0 0.0
    %272 = vmatprep.subr.mxu0 0.0
    %273 = vmatpush1.msra.mxu0 0.0
    %274 = vmatprep.subr.mxu0 0.0
    %275 = vmatpush1.msra.mxu0 0.0
    %276 = vmatprep.subr.mxu0 0.0
    %277 = vmatpush1.msra.mxu0 0.0
    %278 = vmatprep.subr.mxu0 0.0
    %279 = vmatpush1.msra.mxu0 0.0
    %280 = vmatprep.subr.mxu0 0.0
    %281 = vmatpush1.msra.mxu0 0.0
    %282 = vmatprep.subr.mxu0 0.0
    %283 = vmatpush1.msra.mxu0 0.0
    %284 = vmatprep.subr.mxu0 0.0
    %285 = vmatpush1.msra.mxu0 0.0
    %286 = vmatprep.subr.mxu0 0.0
    %287 = vmatpush1.msra.mxu0 0.0
    %288 = vmatprep.subr.mxu0 0.0
    %289 = vmatpush1.msra.mxu0 0.0
    %290 = vmatprep.subr.mxu0 0.0
    %291 = vmatpush1.msra.mxu0 0.0
    %292 = vmatprep.subr.mxu0 0.0
    %293 = vmatpush1.msra.mxu0 0.0
    %294 = vmatprep.subr.mxu0 0.0
    %295 = vmatpush1.msra.mxu0 0.0
    %296 = vmatprep.subr.mxu0 0.0
    %297 = vmatpush1.msra.mxu0 0.0
    %298 = vmatprep.subr.mxu0 0.0
    %299 = vmatpush1.msra.mxu0 0.0
    %300 = vmatprep.subr.mxu0 0.0
    %301 = vmatpush1.msra.mxu0 0.0
    %302 = vmatprep.subr.mxu0 0.0
    %303 = vmatpush1.msra.mxu0 0.0
    %304 = vmatprep.subr.mxu0 0.0
    %305 = vmatpush1.msra.mxu0 0.0
    %306 = vmatprep.subr.mxu0 0.0
    %307 = vmatpush1.msra.mxu0 0.0
    %308 = vmatprep.subr.mxu0 0.0
    %309 = vmatpush1.msra.mxu0 0.0
    %310 = vmatprep.subr.mxu0 0.0
    %311 = vmatpush1.msra.mxu0 0.0
    %312 = vmatprep.subr.mxu0 0.0
    %313 = vmatpush1.msra.mxu0 0.0
    %314 = vmatprep.subr.mxu0 0.0
    %315 = vmatpush1.msra.mxu0 0.0
    %316 = vmatprep.subr.mxu0 0.0
    %317 = vmatpush1.msra.mxu0 0.0
    %318 = vmatprep.subr.mxu0 0.0
    %319 = vmatpush1.msra.mxu0 0.0
    %320 = vmatprep.subr.mxu0 0.0
    %321 = vmatpush1.msra.mxu0 0.0
    %322 = vmatprep.subr.mxu0 0.0
    %323 = vmatpush1.msra.mxu0 0.0
    %324 = vmatprep.subr.mxu0 0.0
    %325 = vmatpush1.msra.mxu0 0.0
    %326 = vmatprep.subr.mxu0 0.0
    %327 = vmatpush1.msra.mxu0 0.0
    %328 = vmatprep.mubr.f32.mxu0 0.0
    %329 = vmatmul.mubr.f32.gmra.mrb[0].mxu0 %v262
    %v330 = vpop.f32.mrb[0].mxu0
    %v331 = vadd.f32 0.0, %v330
    %v332 = vpop.f32.mrb[0].mxu0
    %333 = vdwg.mxu0
    %v334 = vstv %s38
    %v335 = vrcp.pop %v334
    %s336 = vtos %v335
    %s337 = smul.f32 %s37, %s336
    %v338 = vstv %s38
    %v339 = vrcp.pop %v338
    %v340 = vmul.f32 %v255, %v339
    %v341 = vsub.f32 %v45, %v340
    %vm342 = vcmp.ge.f32.partialorder %v341, 0.0
    %v343 = vsel %vm342, 1.0, -1.0
    %v344 = vand.u32 2147483647, %v341
    %v345 = vstv %s337
    %v346 = vsub.f32 %v344, %v345
    %v347 = vmax.f32 %v346, 0.0
    %v348 = vmul.f32 %v343, %v347
    %v349 = vsub.f32 %v45, %v348
    %v350 = vmul.f32 %v255, %v255
    %v351 = vmul.f32 %v53, %v53
    %v352 = vmul.f32 %v349, %v349
    %v353 = vmul.f32 %v255, %v53
    %v354 = vand.u32 2147483647, %v45
    %355 = vst [vmem:[#allocation2] sm:$0x1] %v354
    %356 = vst [vmem:[#allocation2] sm:$0x2] %v354
    %357 = vst [vmem:[#allocation2 + $0x2] sm:$0x1] %v351
    %358 = vst [vmem:[#allocation2 + $0x3] sm:$0x1] %v350
    %v359 = vmul.f32 %v350, %v48
    %360 = vst [vmem:[#allocation2 + $0x4] sm:$0x1] %v359
    %v361 = vmul.f32 %v350, %v49
    %362 = vst [vmem:[#allocation2 + $0x5] sm:$0x1] %v361
    %v363 = vmul.f32 %v351, %v48
    %364 = vst [vmem:[#allocation2 + $0x6] sm:$0x1] %v363
    %v365 = vmul.f32 %v351, %v49
    %366 = vst [vmem:[#allocation2 + $0x7] sm:$0x1] %v365
    %v367 = vmul.f32 %v352, %v48
    %368 = vst [vmem:[#allocation2 + $0x8] sm:$0x1] %v367
    %v369 = vmul.f32 %v352, %v49
    %370 = vst [vmem:[#allocation2 + $0x9] sm:$0x1] %v369
    %v371 = vmul.f32 %v353, %v48
    %372 = vst [vmem:[#allocation2 + $0xa] sm:$0x1] %v371
    %v373 = vmul.f32 %v353, %v49
    %374 = vst [vmem:[#allocation2 + $0xb] sm:$0x1] %v373
    %375 = vst [vmem:[#allocation2 + $0xc] sm:$0x1] %v352
    %376 = vst [vmem:[#allocation2 + $0xd] sm:$0x7] 0.0
    %v377 = vld [vmem:[#allocation2] sm:$0xff]
    %v378 = vld [vmem:[#allocation2 + $0x8] sm:$0xff]
    %379 = vmatprep.subr.mxu0 0.0
    %380 = vmatpush1.xpose.msra.mxu0 %v377
    %381 = vmatprep.subr.mxu0 0.0
    %382 = vmatpush1.xpose.msra.mxu0 %v378
    %383 = vmatprep.subr.mxu0 0.0
    %384 = vmatpush1.xpose.msra.mxu0 0.0
    %385 = vmatprep.subr.mxu0 0.0
    %386 = vmatpush1.xpose.msra.mxu0 0.0
    %387 = vmatprep.subr.mxu0 0.0
    %388 = vmatpush1.xpose.msra.mxu0 0.0
    %389 = vmatprep.subr.mxu0 0.0
    %390 = vmatpush1.xpose.msra.mxu0 0.0
    %391 = vmatprep.subr.mxu0 0.0
    %392 = vmatpush1.xpose.msra.mxu0 0.0
    %393 = vmatprep.subr.mxu0 0.0
    %394 = vmatpush1.xpose.msra.mxu0 0.0
    %395 = vmatprep.subr.mxu0 0.0
    %396 = vmatpush1.xpose.msra.mxu0 0.0
    %397 = vmatprep.subr.mxu0 0.0
    %398 = vmatpush1.xpose.msra.mxu0 0.0
    %399 = vmatprep.subr.mxu0 0.0
    %400 = vmatpush1.xpose.msra.mxu0 0.0
    %401 = vmatprep.subr.mxu0 0.0
    %402 = vmatpush1.xpose.msra.mxu0 0.0
    %403 = vmatprep.subr.mxu0 0.0
    %404 = vmatpush1.xpose.msra.mxu0 0.0
    %405 = vmatprep.subr.mxu0 0.0
    %406 = vmatpush1.xpose.msra.mxu0 0.0
    %407 = vmatprep.subr.mxu0 0.0
    %408 = vmatpush1.xpose.msra.mxu0 0.0
    %409 = vmatprep.subr.mxu0 0.0
    %410 = vmatpush1.xpose.msra.mxu0 0.0
    %411 = vmatprep.subr.mxu0 0.0
    %412 = vmatpush1.xpose.msra.mxu0 0.0
    %413 = vmatprep.subr.mxu0 0.0
    %414 = vmatpush1.xpose.msra.mxu0 0.0
    %415 = vmatprep.subr.mxu0 0.0
    %416 = vmatpush1.xpose.msra.mxu0 0.0
    %417 = vmatprep.subr.mxu0 0.0
    %418 = vmatpush1.xpose.msra.mxu0 0.0
    %419 = vmatprep.subr.mxu0 0.0
    %420 = vmatpush1.xpose.msra.mxu0 0.0
    %421 = vmatprep.subr.mxu0 0.0
    %422 = vmatpush1.xpose.msra.mxu0 0.0
    %423 = vmatprep.subr.mxu0 0.0
    %424 = vmatpush1.xpose.msra.mxu0 0.0
    %425 = vmatprep.subr.mxu0 0.0
    %426 = vmatpush1.xpose.msra.mxu0 0.0
    %427 = vmatprep.subr.mxu0 0.0
    %428 = vmatpush1.xpose.msra.mxu0 0.0
    %429 = vmatprep.subr.mxu0 0.0
    %430 = vmatpush1.xpose.msra.mxu0 0.0
    %431 = vmatprep.subr.mxu0 0.0
    %432 = vmatpush1.xpose.msra.mxu0 0.0
    %433 = vmatprep.subr.mxu0 0.0
    %434 = vmatpush1.xpose.msra.mxu0 0.0
    %435 = vmatprep.subr.mxu0 0.0
    %436 = vmatpush1.xpose.msra.mxu0 0.0
    %437 = vmatprep.subr.mxu0 0.0
    %438 = vmatpush1.xpose.msra.mxu0 0.0
    %439 = vmatprep.subr.mxu0 0.0
    %440 = vmatpush1.xpose.msra.mxu0 0.0
    %441 = vmatprep.subr.mxu0 0.0
    %442 = vmatpush1.xpose.msra.mxu0 0.0
    %443 = vmatprep.mubr.f32.mxu0 0.0
    %444 = vmatmul.mubr.f32.gmra.mrb[0].mxu0 1.0
    %v445 = vpop.f32.mrb[0].mxu0
    %v446 = vadd.f32 0.0, %v445
    %v447 = vpop.f32.mrb[0].mxu0
    %448 = vdwg.mxu0
    %v449 = vmax.f32 %v446, 0.0
    %v450 = vrsqrt.pop %v449
    %v451 = vmul.f32 %v449, %v450
    %vm452 = vcmp.eq.f32.partialorder %v449, inf
    %v453 = vsel %vm452, %v449, %v451
    %vm454 = vcmp.eq.f32.partialorder %v449, 0.0
    %v455 = vand.u32 %v449, 2147483648
    %v456 = vsel %vm454, %v455, %v453
    %vm457 = vcmp.gt.f32.partialorder %v456, 1e-20
    %v458 = vrcp.pop %v456
    %v459 = vmul.f32 1.0, %v458
    %v460 = vsel %vm457, %v459, 1.0
    %462 = vrot.lane.b32.xlu0 %v460, 1
    %v463 = vpop.permute.xlu0 %462
    %v465 = vmul.f32 %v460, %v463
    %v466 = vmul.f32 %v331, 0.5
    %v467 = vstv %s37
    %v468 = vmul.f32 %v467, %v446
    %v469 = vadd.f32 %v466, %v468
    %471 = vrot.lane.b32.xlu0 %v465, 7
    %v472 = vpop.permute.xlu0 %471
    %v474 = vmul.f32 %v446, %v472
    %475 = vrot.lane.b32.xlu0 %v465, 8
    %v476 = vpop.permute.xlu0 %475
    %v478 = vmul.f32 %v446, %v476
    %v479 = vlaneseq
    %v480 = vand.u32 %v479, 127
    %vm481 = vcmp.ge.s32.totalorder %v480, 4
    %vm482 = vcmp.le.s32.totalorder %v480, 9
    %vm483 = vmand %vm481, %vm482
    %v484 = vsel %vm483, %v456, 0.0
    %vm485 = vcmp.eq.s32.totalorder %v480, 1
    %487 = vset.pattern.permute.xlu0 1
    %488 = vperm.xlu0 %487, %v469
    %v489 = vpop.permute.xlu0 %488
    %v491 = vsel %vm485, %v489, 0.0
    %v492 = vadd.f32 %v484, %v491
    %vm493 = vcmp.eq.s32.totalorder %v480, 2
    %495 = vset.pattern.permute.xlu0 1
    %496 = vperm.xlu0 %495, %v466
    %v497 = vpop.permute.xlu0 %496
    %v499 = vsel %vm493, %v497, 0.0
    %v500 = vadd.f32 %v492, %v499
    %vm501 = vcmp.eq.s32.totalorder %v480, 3
    %503 = vset.pattern.permute.xlu0 1
    %504 = vperm.xlu0 %503, %v468
    %v505 = vpop.permute.xlu0 %504
    %v507 = vsel %vm501, %v505, 0.0
    %v508 = vadd.f32 %v500, %v507
    %509 = vset.pattern.permute.xlu0 0
    %510 = vperm.xlu0 %509, %v469
    %v511 = vpop.permute.xlu0 %510
    %v513 = vsel %vm485, %v511, 0.0
    %514 = vset.pattern.permute.xlu0 0
    %515 = vperm.xlu0 %514, %v466
    %v516 = vpop.permute.xlu0 %515
    %v518 = vsel %vm493, %v516, 0.0
    %v519 = vadd.f32 %v513, %v518
    %520 = vset.pattern.permute.xlu0 0
    %521 = vperm.xlu0 %520, %v468
    %v522 = vpop.permute.xlu0 %521
    %v524 = vsel %vm501, %v522, 0.0
    %v525 = vadd.f32 %v519, %v524
    %v526 = vadd.f32 %v508, 1.0
    %v527 = vlog2.pop %v526
    %v528 = vmul.f32 %v527, 0.6931472
    %v529 = vadd.f32 %v525, 1.0
    %v530 = vlog2.pop %v529
    %v531 = vmul.f32 %v530, 0.6931472
    %v532 = vsub.f32 %v528, %v531
    %vm533 = vcmp.eq.s32.totalorder %v480, 0
    %v534 = vsel %vm533, %v467, 0.0
    %v535 = vadd.f32 %v532, %v534
    %vm536 = vcmp.eq.s32.totalorder %v480, 10
    %538 = vset.pattern.permute.xlu0 10
    %539 = vperm.xlu0 %538, %v474
    %v540 = vpop.permute.xlu0 %539
    %v542 = vsel %vm536, %v540, 0.0
    %v543 = vadd.f32 %v535, %v542
    %vm544 = vcmp.eq.s32.totalorder %v480, 11
    %546 = vset.pattern.permute.xlu0 11
    %547 = vperm.xlu0 %546, %v478
    %v548 = vpop.permute.xlu0 %547
    %v550 = vsel %vm544, %v548, 0.0
    %v551 = vadd.f32 %v543, %v550
    %v552 = vld [vmem:[%s4] sm:$0xff]
    %v553 = vld [vmem:[%s4 + $0x8] sm:$0xff]
    %vm554 = vcmask 130048
    %v556 = vsel %vm554, %v551, 0
    %558 = vmatprep.subr.mxu0 0.0
    %559 = vmatpush1.msra.mxu0 %v552
    %560 = vmatprep.subr.mxu0 0.0
    %561 = vmatpush1.msra.mxu0 %v553
    %562 = vmatprep.subr.mxu0 0.0
    %563 = vmatpush1.msra.mxu0 0.0
    %564 = vmatprep.subr.mxu0 0.0
    %565 = vmatpush1.msra.mxu0 0.0
    %566 = vmatprep.subr.mxu0 0.0
    %567 = vmatpush1.msra.mxu0 0.0
    %568 = vmatprep.subr.mxu0 0.0
    %569 = vmatpush1.msra.mxu0 0.0
    %570 = vmatprep.subr.mxu0 0.0
    %571 = vmatpush1.msra.mxu0 0.0
    %572 = vmatprep.subr.mxu0 0.0
    %573 = vmatpush1.msra.mxu0 0.0
    %574 = vmatprep.subr.mxu0 0.0
    %575 = vmatpush1.msra.mxu0 0.0
    %576 = vmatprep.subr.mxu0 0.0
    %577 = vmatpush1.msra.mxu0 0.0
    %578 = vmatprep.subr.mxu0 0.0
    %579 = vmatpush1.msra.mxu0 0.0
    %580 = vmatprep.subr.mxu0 0.0
    %581 = vmatpush1.msra.mxu0 0.0
    %582 = vmatprep.subr.mxu0 0.0
    %583 = vmatpush1.msra.mxu0 0.0
    %584 = vmatprep.subr.mxu0 0.0
    %585 = vmatpush1.msra.mxu0 0.0
    %586 = vmatprep.subr.mxu0 0.0
    %587 = vmatpush1.msra.mxu0 0.0
    %588 = vmatprep.subr.mxu0 0.0
    %589 = vmatpush1.msra.mxu0 0.0
    %590 = vmatprep.subr.mxu0 0.0
    %591 = vmatpush1.msra.mxu0 0.0
    %592 = vmatprep.subr.mxu0 0.0
    %593 = vmatpush1.msra.mxu0 0.0
    %594 = vmatprep.subr.mxu0 0.0
    %595 = vmatpush1.msra.mxu0 0.0
    %596 = vmatprep.subr.mxu0 0.0
    %597 = vmatpush1.msra.mxu0 0.0
    %598 = vmatprep.subr.mxu0 0.0
    %599 = vmatpush1.msra.mxu0 0.0
    %600 = vmatprep.subr.mxu0 0.0
    %601 = vmatpush1.msra.mxu0 0.0
    %602 = vmatprep.subr.mxu0 0.0
    %603 = vmatpush1.msra.mxu0 0.0
    %604 = vmatprep.subr.mxu0 0.0
    %605 = vmatpush1.msra.mxu0 0.0
    %606 = vmatprep.subr.mxu0 0.0
    %607 = vmatpush1.msra.mxu0 0.0
    %608 = vmatprep.subr.mxu0 0.0
    %609 = vmatpush1.msra.mxu0 0.0
    %610 = vmatprep.subr.mxu0 0.0
    %611 = vmatpush1.msra.mxu0 0.0
    %612 = vmatprep.subr.mxu0 0.0
    %613 = vmatpush1.msra.mxu0 0.0
    %614 = vmatprep.subr.mxu0 0.0
    %615 = vmatpush1.msra.mxu0 0.0
    %616 = vmatprep.subr.mxu0 0.0
    %617 = vmatpush1.msra.mxu0 0.0
    %618 = vmatprep.subr.mxu0 0.0
    %619 = vmatpush1.msra.mxu0 0.0
    %620 = vmatprep.subr.mxu0 0.0
    %621 = vmatpush1.msra.mxu0 0.0
    %622 = vmatprep.mubr.f32.mxu0 0.0
    %623 = vmatmul.mubr.f32.gmra.mrb[0].mxu0 %v556
    %v624 = vpop.f32.mrb[0].mxu0
    %v625 = vadd.f32 0.0, %v624
    %v626 = vpop.f32.mrb[0].mxu0
    %627 = vdwg.mxu0
    %v628 = vmax.f32 %v625, 0.0
    %v629 = vld [vmem:[%s4 + $0x20] sm:$0xff]
    %v630 = vld [vmem:[%s4 + $0x28] sm:$0xff]
    %v631 = vld [vmem:[%s4 + $0x30] sm:$0xff]
    %v632 = vld [vmem:[%s4 + $0x38] sm:$0xff]
    %vm633 = vcmask 261120
    %v635 = vsel %vm633, %v628, 0
    %637 = vmatprep.subr.mxu0 0.0
    %638 = vmatpush1.msra.mxu0 %v629
    %639 = vmatprep.subr.mxu0 0.0
    %640 = vmatpush1.msra.mxu0 %v630
    %641 = vmatprep.subr.mxu0 0.0
    %642 = vmatpush1.msra.mxu0 %v631
    %643 = vmatprep.subr.mxu0 0.0
    %644 = vmatpush1.msra.mxu0 %v632
    %645 = vmatprep.subr.mxu0 0.0
    %646 = vmatpush1.msra.mxu0 0.0
    %647 = vmatprep.subr.mxu0 0.0
    %648 = vmatpush1.msra.mxu0 0.0
    %649 = vmatprep.subr.mxu0 0.0
    %650 = vmatpush1.msra.mxu0 0.0
    %651 = vmatprep.subr.mxu0 0.0
    %652 = vmatpush1.msra.mxu0 0.0
    %653 = vmatprep.subr.mxu0 0.0
    %654 = vmatpush1.msra.mxu0 0.0
    %655 = vmatprep.subr.mxu0 0.0
    %656 = vmatpush1.msra.mxu0 0.0
    %657 = vmatprep.subr.mxu0 0.0
    %658 = vmatpush1.msra.mxu0 0.0
    %659 = vmatprep.subr.mxu0 0.0
    %660 = vmatpush1.msra.mxu0 0.0
    %661 = vmatprep.subr.mxu0 0.0
    %662 = vmatpush1.msra.mxu0 0.0
    %663 = vmatprep.subr.mxu0 0.0
    %664 = vmatpush1.msra.mxu0 0.0
    %665 = vmatprep.subr.mxu0 0.0
    %666 = vmatpush1.msra.mxu0 0.0
    %667 = vmatprep.subr.mxu0 0.0
    %668 = vmatpush1.msra.mxu0 0.0
    %669 = vmatprep.subr.mxu0 0.0
    %670 = vmatpush1.msra.mxu0 0.0
    %671 = vmatprep.subr.mxu0 0.0
    %672 = vmatpush1.msra.mxu0 0.0
    %673 = vmatprep.subr.mxu0 0.0
    %674 = vmatpush1.msra.mxu0 0.0
    %675 = vmatprep.subr.mxu0 0.0
    %676 = vmatpush1.msra.mxu0 0.0
    %677 = vmatprep.subr.mxu0 0.0
    %678 = vmatpush1.msra.mxu0 0.0
    %679 = vmatprep.subr.mxu0 0.0
    %680 = vmatpush1.msra.mxu0 0.0
    %681 = vmatprep.subr.mxu0 0.0
    %682 = vmatpush1.msra.mxu0 0.0
    %683 = vmatprep.subr.mxu0 0.0
    %684 = vmatpush1.msra.mxu0 0.0
    %685 = vmatprep.subr.mxu0 0.0
    %686 = vmatpush1.msra.mxu0 0.0
    %687 = vmatprep.subr.mxu0 0.0
    %688 = vmatpush1.msra.mxu0 0.0
    %689 = vmatprep.subr.mxu0 0.0
    %690 = vmatpush1.msra.mxu0 0.0
    %691 = vmatprep.subr.mxu0 0.0
    %692 = vmatpush1.msra.mxu0 0.0
    %693 = vmatprep.subr.mxu0 0.0
    %694 = vmatpush1.msra.mxu0 0.0
    %695 = vmatprep.subr.mxu0 0.0
    %696 = vmatpush1.msra.mxu0 0.0
    %697 = vmatprep.subr.mxu0 0.0
    %698 = vmatpush1.msra.mxu0 0.0
    %699 = vmatprep.subr.mxu0 0.0
    %700 = vmatpush1.msra.mxu0 0.0
    %701 = vmatprep.mubr.f32.mxu0 0.0
    %702 = vmatmul.mubr.f32.gmra.mrb[0].mxu0 %v635
    %v703 = vpop.f32.mrb[0].mxu0
    %v704 = vadd.f32 0.0, %v703
    %v705 = vpop.f32.mrb[0].mxu0
    %706 = vdwg.mxu0
    %v707 = vmax.f32 %v704, 0.0
    %v708 = vld [vmem:[%s4 + $0x40] sm:$0xff]
    %v709 = vld [vmem:[%s4 + $0x48] sm:$0xff]
    %v710 = vld [vmem:[%s4 + $0x50] sm:$0xff]
    %v711 = vld [vmem:[%s4 + $0x58] sm:$0xff]
    %v713 = vsel %vm633, %v707, 0
    %715 = vmatprep.subr.mxu0 0.0
    %716 = vmatpush1.msra.mxu0 %v708
    %717 = vmatprep.subr.mxu0 0.0
    %718 = vmatpush1.msra.mxu0 %v709
    %719 = vmatprep.subr.mxu0 0.0
    %720 = vmatpush1.msra.mxu0 %v710
    %721 = vmatprep.subr.mxu0 0.0
    %722 = vmatpush1.msra.mxu0 %v711
    %723 = vmatprep.subr.mxu0 0.0
    %724 = vmatpush1.msra.mxu0 0.0
    %725 = vmatprep.subr.mxu0 0.0
    %726 = vmatpush1.msra.mxu0 0.0
    %727 = vmatprep.subr.mxu0 0.0
    %728 = vmatpush1.msra.mxu0 0.0
    %729 = vmatprep.subr.mxu0 0.0
    %730 = vmatpush1.msra.mxu0 0.0
    %731 = vmatprep.subr.mxu0 0.0
    %732 = vmatpush1.msra.mxu0 0.0
    %733 = vmatprep.subr.mxu0 0.0
    %734 = vmatpush1.msra.mxu0 0.0
    %735 = vmatprep.subr.mxu0 0.0
    %736 = vmatpush1.msra.mxu0 0.0
    %737 = vmatprep.subr.mxu0 0.0
    %738 = vmatpush1.msra.mxu0 0.0
    %739 = vmatprep.subr.mxu0 0.0
    %740 = vmatpush1.msra.mxu0 0.0
    %741 = vmatprep.subr.mxu0 0.0
    %742 = vmatpush1.msra.mxu0 0.0
    %743 = vmatprep.subr.mxu0 0.0
    %744 = vmatpush1.msra.mxu0 0.0
    %745 = vmatprep.subr.mxu0 0.0
    %746 = vmatpush1.msra.mxu0 0.0
    %747 = vmatprep.subr.mxu0 0.0
    %748 = vmatpush1.msra.mxu0 0.0
    %749 = vmatprep.subr.mxu0 0.0
    %750 = vmatpush1.msra.mxu0 0.0
    %751 = vmatprep.subr.mxu0 0.0
    %752 = vmatpush1.msra.mxu0 0.0
    %753 = vmatprep.subr.mxu0 0.0
    %754 = vmatpush1.msra.mxu0 0.0
    %755 = vmatprep.subr.mxu0 0.0
    %756 = vmatpush1.msra.mxu0 0.0
    %757 = vmatprep.subr.mxu0 0.0
    %758 = vmatpush1.msra.mxu0 0.0
    %759 = vmatprep.subr.mxu0 0.0
    %760 = vmatpush1.msra.mxu0 0.0
    %761 = vmatprep.subr.mxu0 0.0
    %762 = vmatpush1.msra.mxu0 0.0
    %763 = vmatprep.subr.mxu0 0.0
    %764 = vmatpush1.msra.mxu0 0.0
    %765 = vmatprep.subr.mxu0 0.0
    %766 = vmatpush1.msra.mxu0 0.0
    %767 = vmatprep.subr.mxu0 0.0
    %768 = vmatpush1.msra.mxu0 0.0
    %769 = vmatprep.subr.mxu0 0.0
    %770 = vmatpush1.msra.mxu0 0.0
    %771 = vmatprep.subr.mxu0 0.0
    %772 = vmatpush1.msra.mxu0 0.0
    %773 = vmatprep.subr.mxu0 0.0
    %774 = vmatpush1.msra.mxu0 0.0
    %775 = vmatprep.subr.mxu0 0.0
    %776 = vmatpush1.msra.mxu0 0.0
    %777 = vmatprep.subr.mxu0 0.0
    %778 = vmatpush1.msra.mxu0 0.0
    %779 = vmatprep.mubr.f32.mxu0 0.0
    %780 = vmatmul.mubr.f32.gmra.mrb[0].mxu0 %v713
    %v781 = vpop.f32.mrb[0].mxu0
    %v782 = vadd.f32 0.0, %v781
    %v783 = vpop.f32.mrb[0].mxu0
    %784 = vdwg.mxu0
    %v785 = vmax.f32 %v782, 0.0
    %v786 = vld [vmem:[%s4 + $0x60] sm:$0xff]
    %v787 = vld [vmem:[%s4 + $0x68] sm:$0xff]
    %v788 = vld [vmem:[%s4 + $0x70] sm:$0xff]
    %v789 = vld [vmem:[%s4 + $0x78] sm:$0xff]
    %v791 = vsel %vm633, %v785, 0
    %793 = vmatprep.subr.mxu0 0.0
    %794 = vmatpush1.msra.mxu0 %v786
    %795 = vmatprep.subr.mxu0 0.0
    %796 = vmatpush1.msra.mxu0 %v787
    %797 = vmatprep.subr.mxu0 0.0
    %798 = vmatpush1.msra.mxu0 %v788
    %799 = vmatprep.subr.mxu0 0.0
    %800 = vmatpush1.msra.mxu0 %v789
    %801 = vmatprep.subr.mxu0 0.0
    %802 = vmatpush1.msra.mxu0 0.0
    %803 = vmatprep.subr.mxu0 0.0
    %804 = vmatpush1.msra.mxu0 0.0
    %805 = vmatprep.subr.mxu0 0.0
    %806 = vmatpush1.msra.mxu0 0.0
    %807 = vmatprep.subr.mxu0 0.0
    %808 = vmatpush1.msra.mxu0 0.0
    %809 = vmatprep.subr.mxu0 0.0
    %810 = vmatpush1.msra.mxu0 0.0
    %811 = vmatprep.subr.mxu0 0.0
    %812 = vmatpush1.msra.mxu0 0.0
    %813 = vmatprep.subr.mxu0 0.0
    %814 = vmatpush1.msra.mxu0 0.0
    %815 = vmatprep.subr.mxu0 0.0
    %816 = vmatpush1.msra.mxu0 0.0
    %817 = vmatprep.subr.mxu0 0.0
    %818 = vmatpush1.msra.mxu0 0.0
    %819 = vmatprep.subr.mxu0 0.0
    %820 = vmatpush1.msra.mxu0 0.0
    %821 = vmatprep.subr.mxu0 0.0
    %822 = vmatpush1.msra.mxu0 0.0
    %823 = vmatprep.subr.mxu0 0.0
    %824 = vmatpush1.msra.mxu0 0.0
    %825 = vmatprep.subr.mxu0 0.0
    %826 = vmatpush1.msra.mxu0 0.0
    %827 = vmatprep.subr.mxu0 0.0
    %828 = vmatpush1.msra.mxu0 0.0
    %829 = vmatprep.subr.mxu0 0.0
    %830 = vmatpush1.msra.mxu0 0.0
    %831 = vmatprep.subr.mxu0 0.0
    %832 = vmatpush1.msra.mxu0 0.0
    %833 = vmatprep.subr.mxu0 0.0
    %834 = vmatpush1.msra.mxu0 0.0
    %835 = vmatprep.subr.mxu0 0.0
    %836 = vmatpush1.msra.mxu0 0.0
    %837 = vmatprep.subr.mxu0 0.0
    %838 = vmatpush1.msra.mxu0 0.0
    %839 = vmatprep.subr.mxu0 0.0
    %840 = vmatpush1.msra.mxu0 0.0
    %841 = vmatprep.subr.mxu0 0.0
    %842 = vmatpush1.msra.mxu0 0.0
    %843 = vmatprep.subr.mxu0 0.0
    %844 = vmatpush1.msra.mxu0 0.0
    %845 = vmatprep.subr.mxu0 0.0
    %846 = vmatpush1.msra.mxu0 0.0
    %847 = vmatprep.subr.mxu0 0.0
    %848 = vmatpush1.msra.mxu0 0.0
    %849 = vmatprep.subr.mxu0 0.0
    %850 = vmatpush1.msra.mxu0 0.0
    %851 = vmatprep.subr.mxu0 0.0
    %852 = vmatpush1.msra.mxu0 0.0
    %853 = vmatprep.subr.mxu0 0.0
    %854 = vmatpush1.msra.mxu0 0.0
    %855 = vmatprep.subr.mxu0 0.0
    %856 = vmatpush1.msra.mxu0 0.0
    %857 = vmatprep.mubr.f32.mxu0 0.0
    %858 = vmatmul.mubr.f32.gmra.mrb[0].mxu0 %v791
    %v859 = vpop.f32.mrb[0].mxu0
    %v860 = vadd.f32 0.0, %v859
    %v861 = vpop.f32.mrb[0].mxu0
    %862 = vdwg.mxu0
    %863 = vset.pattern.permute.xlu0 3
    %864 = vperm.xlu0 %863, %v460
    %v865 = vpop.permute.xlu0 %864
    %v867 = vmul.f32 %v255, %v865
    %868 = vset.pattern.permute.xlu0 2
    %869 = vperm.xlu0 %868, %v460
    %v870 = vpop.permute.xlu0 %869
    %v872 = vmul.f32 %v53, %v870
    %873 = vset.pattern.permute.xlu0 12
    %874 = vperm.xlu0 %873, %v460
    %v875 = vpop.permute.xlu0 %874
    %v877 = vmul.f32 %v349, %v875
    %v878 = vmul.f32 %v867, %v48
    %v879 = vmul.f32 %v867, %v49
    %v880 = vmul.f32 %v877, %v48
    %v881 = vmul.f32 %v877, %v49
    %v882 = vmul.f32 %v872, %v48
    %v883 = vmul.f32 %v872, %v49
    %884 = vst [vmem:[#allocation2] sm:$0x1] %v878
    %885 = vst [vmem:[#allocation2 + $0x1] sm:$0x1] %v879
    %886 = vst [vmem:[#allocation2 + $0x2] sm:$0x1] %v880
    %887 = vst [vmem:[#allocation2 + $0x3] sm:$0x1] %v881
    %888 = vst [vmem:[#allocation2 + $0x4] sm:$0x1] %v882
    %889 = vst [vmem:[#allocation2 + $0x5] sm:$0x1] %v883
    %v890 = vmul.f32 %v879, %v883
    %891 = vst [vmem:[#allocation2 + $0x6] sm:$0x1] %v890
    %v892 = vmul.f32 %v878, %v882
    %893 = vst [vmem:[#allocation2 + $0x7] sm:$0x1] %v892
    %v894 = vld [vmem:[#allocation2] sm:$0xff]
    %v895 = vld [vmem:[%s5] sm:$0xff]
    %v896 = vld [vmem:[%s5 + $0x8] sm:$0xff]
    %v897 = vld [vmem:[%s5 + $0x10] sm:$0xff]
    %v898 = vld [vmem:[%s5 + $0x18] sm:$0xff]
    %v899 = vlaneseq
    %v900 = vshrl.u32 %v899, 7
    %v901 = vsub.s32 0, %v900
    %v902 = vrot.slane %v860, %v901
    %v903 = vmul.f32 %v895, %v902
    %v904 = vmul.f32 %v896, %v902
    %v905 = vmul.f32 %v897, %v902
    %v906 = vmul.f32 %v898, %v902
    %vm907 = vcmask 64512
    %v909 = vsel %vm907, %v903, 0
    %v912 = vsel %vm907, %v904, 0
    %v915 = vsel %vm907, %v905, 0
    %v918 = vsel %vm907, %v906, 0
    %920 = vmatprep.subr.mxu0 0.0
    %921 = vmatpush1.msra.mxu0 %v894
    %922 = vmatprep.subr.mxu0 0.0
    %923 = vmatpush1.msra.mxu0 0.0
    %924 = vmatprep.subr.mxu0 0.0
    %925 = vmatpush1.msra.mxu0 0.0
    %926 = vmatprep.subr.mxu0 0.0
    %927 = vmatpush1.msra.mxu0 0.0
    %928 = vmatprep.subr.mxu0 0.0
    %929 = vmatpush1.msra.mxu0 0.0
    %930 = vmatprep.subr.mxu0 0.0
    %931 = vmatpush1.msra.mxu0 0.0
    %932 = vmatprep.subr.mxu0 0.0
    %933 = vmatpush1.msra.mxu0 0.0
    %934 = vmatprep.subr.mxu0 0.0
    %935 = vmatpush1.msra.mxu0 0.0
    %936 = vmatprep.subr.mxu0 0.0
    %937 = vmatpush1.msra.mxu0 0.0
    %938 = vmatprep.subr.mxu0 0.0
    %939 = vmatpush1.msra.mxu0 0.0
    %940 = vmatprep.subr.mxu0 0.0
    %941 = vmatpush1.msra.mxu0 0.0
    %942 = vmatprep.subr.mxu0 0.0
    %943 = vmatpush1.msra.mxu0 0.0
    %944 = vmatprep.subr.mxu0 0.0
    %945 = vmatpush1.msra.mxu0 0.0
    %946 = vmatprep.subr.mxu0 0.0
    %947 = vmatpush1.msra.mxu0 0.0
    %948 = vmatprep.subr.mxu0 0.0
    %949 = vmatpush1.msra.mxu0 0.0
    %950 = vmatprep.subr.mxu0 0.0
    %951 = vmatpush1.msra.mxu0 0.0
    %952 = vmatprep.subr.mxu0 0.0
    %953 = vmatpush1.msra.mxu0 0.0
    %954 = vmatprep.subr.mxu0 0.0
    %955 = vmatpush1.msra.mxu0 0.0
    %956 = vmatprep.subr.mxu0 0.0
    %957 = vmatpush1.msra.mxu0 0.0
    %958 = vmatprep.subr.mxu0 0.0
    %959 = vmatpush1.msra.mxu0 0.0
    %960 = vmatprep.subr.mxu0 0.0
    %961 = vmatpush1.msra.mxu0 0.0
    %962 = vmatprep.subr.mxu0 0.0
    %963 = vmatpush1.msra.mxu0 0.0
    %964 = vmatprep.subr.mxu0 0.0
    %965 = vmatpush1.msra.mxu0 0.0
    %966 = vmatprep.subr.mxu0 0.0
    %967 = vmatpush1.msra.mxu0 0.0
    %968 = vmatprep.subr.mxu0 0.0
    %969 = vmatpush1.msra.mxu0 0.0
    %970 = vmatprep.subr.mxu0 0.0
    %971 = vmatpush1.msra.mxu0 0.0
    %972 = vmatprep.subr.mxu0 0.0
    %973 = vmatpush1.msra.mxu0 0.0
    %974 = vmatprep.subr.mxu0 0.0
    %975 = vmatpush1.msra.mxu0 0.0
    %976 = vmatprep.subr.mxu0 0.0
    %977 = vmatpush1.msra.mxu0 0.0
    %978 = vmatprep.subr.mxu0 0.0
    %979 = vmatpush1.msra.mxu0 0.0
    %980 = vmatprep.subr.mxu0 0.0
    %981 = vmatpush1.msra.mxu0 0.0
    %982 = vmatprep.subr.mxu0 0.0
    %983 = vmatpush1.msra.mxu0 0.0
    %984 = vmatprep.mubr.f32.mxu0 0.0
    %985 = vmatmul.mubr.f32.gmra.mrb[0].mxu0 %v909
    %v986 = vpop.f32.mrb[0].mxu0
    %v987 = vadd.f32 0.0, %v986
    %v988 = vpop.f32.mrb[0].mxu0
    %989 = vmatprep.mubr.f32.mxu0 0.0
    %990 = vmatmul.mubr.f32.gmra.mrb[0].mxu0 %v912
    %v991 = vpop.f32.mrb[0].mxu0
    %v992 = vadd.f32 0.0, %v991
    %v993 = vpop.f32.mrb[0].mxu0
    %994 = vmatprep.mubr.f32.mxu0 0.0
    %995 = vmatmul.mubr.f32.gmra.mrb[0].mxu0 %v915
    %v996 = vpop.f32.mrb[0].mxu0
    %v997 = vadd.f32 0.0, %v996
    %v998 = vpop.f32.mrb[0].mxu0
    %999 = vmatprep.mubr.f32.mxu0 0.0
    %1000 = vmatmul.mubr.f32.gmra.mrb[0].mxu0 %v918
    %v1001 = vpop.f32.mrb[0].mxu0
    %v1002 = vadd.f32 0.0, %v1001
    %v1003 = vpop.f32.mrb[0].mxu0
    %1004 = vdwg.mxu0
    %v1005 = vmax.f32 %v987, 0.0
    %v1006 = vmax.f32 %v992, 0.0
    %v1007 = vmax.f32 %v997, 0.0
    %v1008 = vmax.f32 %v1002, 0.0
    %v1009 = vld [vmem:[%s5 + $0x20] sm:$0xff]
    %v1010 = vld [vmem:[%s5 + $0x28] sm:$0xff]
    %v1011 = vld [vmem:[%s5 + $0x30] sm:$0xff]
    %v1012 = vld [vmem:[%s5 + $0x38] sm:$0xff]
    %v1014 = vsel %vm633, %v1009, 0
    %v1017 = vsel %vm633, %v1010, 0
    %v1020 = vsel %vm633, %v1011, 0
    %v1023 = vsel %vm633, %v1012, 0
    %1025 = vmatprep.subr.mxu0 0.0
    %1026 = vmatpush1.msra.mxu0 %v1005
    %1027 = vmatprep.subr.mxu0 0.0
    %1028 = vmatpush1.msra.mxu0 %v1006
    %1029 = vmatprep.subr.mxu0 0.0
    %1030 = vmatpush1.msra.mxu0 %v1007
    %1031 = vmatprep.subr.mxu0 0.0
    %1032 = vmatpush1.msra.mxu0 %v1008
    %1033 = vmatprep.subr.mxu0 0.0
    %1034 = vmatpush1.msra.mxu0 0.0
    %1035 = vmatprep.subr.mxu0 0.0
    %1036 = vmatpush1.msra.mxu0 0.0
    %1037 = vmatprep.subr.mxu0 0.0
    %1038 = vmatpush1.msra.mxu0 0.0
    %1039 = vmatprep.subr.mxu0 0.0
    %1040 = vmatpush1.msra.mxu0 0.0
    %1041 = vmatprep.subr.mxu0 0.0
    %1042 = vmatpush1.msra.mxu0 0.0
    %1043 = vmatprep.subr.mxu0 0.0
    %1044 = vmatpush1.msra.mxu0 0.0
    %1045 = vmatprep.subr.mxu0 0.0
    %1046 = vmatpush1.msra.mxu0 0.0
    %1047 = vmatprep.subr.mxu0 0.0
    %1048 = vmatpush1.msra.mxu0 0.0
    %1049 = vmatprep.subr.mxu0 0.0
    %1050 = vmatpush1.msra.mxu0 0.0
    %1051 = vmatprep.subr.mxu0 0.0
    %1052 = vmatpush1.msra.mxu0 0.0
    %1053 = vmatprep.subr.mxu0 0.0
    %1054 = vmatpush1.msra.mxu0 0.0
    %1055 = vmatprep.subr.mxu0 0.0
    %1056 = vmatpush1.msra.mxu0 0.0
    %1057 = vmatprep.subr.mxu0 0.0
    %1058 = vmatpush1.msra.mxu0 0.0
    %1059 = vmatprep.subr.mxu0 0.0
    %1060 = vmatpush1.msra.mxu0 0.0
    %1061 = vmatprep.subr.mxu0 0.0
    %1062 = vmatpush1.msra.mxu0 0.0
    %1063 = vmatprep.subr.mxu0 0.0
    %1064 = vmatpush1.msra.mxu0 0.0
    %1065 = vmatprep.subr.mxu0 0.0
    %1066 = vmatpush1.msra.mxu0 0.0
    %1067 = vmatprep.subr.mxu0 0.0
    %1068 = vmatpush1.msra.mxu0 0.0
    %1069 = vmatprep.subr.mxu0 0.0
    %1070 = vmatpush1.msra.mxu0 0.0
    %1071 = vmatprep.subr.mxu0 0.0
    %1072 = vmatpush1.msra.mxu0 0.0
    %1073 = vmatprep.subr.mxu0 0.0
    %1074 = vmatpush1.msra.mxu0 0.0
    %1075 = vmatprep.subr.mxu0 0.0
    %1076 = vmatpush1.msra.mxu0 0.0
    %1077 = vmatprep.subr.mxu0 0.0
    %1078 = vmatpush1.msra.mxu0 0.0
    %1079 = vmatprep.subr.mxu0 0.0
    %1080 = vmatpush1.msra.mxu0 0.0
    %1081 = vmatprep.subr.mxu0 0.0
    %1082 = vmatpush1.msra.mxu0 0.0
    %1083 = vmatprep.subr.mxu0 0.0
    %1084 = vmatpush1.msra.mxu0 0.0
    %1085 = vmatprep.subr.mxu0 0.0
    %1086 = vmatpush1.msra.mxu0 0.0
    %1087 = vmatprep.subr.mxu0 0.0
    %1088 = vmatpush1.msra.mxu0 0.0
    %1089 = vmatprep.mubr.f32.mxu0 0.0
    %1090 = vmatmul.mubr.f32.gmra.mrb[0].mxu0 %v1014
    %v1091 = vpop.f32.mrb[0].mxu0
    %v1092 = vadd.f32 0.0, %v1091
    %v1093 = vpop.f32.mrb[0].mxu0
    %1094 = vmatprep.mubr.f32.mxu0 0.0
    %1095 = vmatmul.mubr.f32.gmra.mrb[0].mxu0 %v1017
    %v1096 = vpop.f32.mrb[0].mxu0
    %v1097 = vadd.f32 0.0, %v1096
    %v1098 = vpop.f32.mrb[0].mxu0
    %1099 = vmatprep.mubr.f32.mxu0 0.0
    %1100 = vmatmul.mubr.f32.gmra.mrb[0].mxu0 %v1020
    %v1101 = vpop.f32.mrb[0].mxu0
    %v1102 = vadd.f32 0.0, %v1101
    %v1103 = vpop.f32.mrb[0].mxu0
    %1104 = vmatprep.mubr.f32.mxu0 0.0
    %1105 = vmatmul.mubr.f32.gmra.mrb[0].mxu0 %v1023
    %v1106 = vpop.f32.mrb[0].mxu0
    %v1107 = vadd.f32 0.0, %v1106
    %v1108 = vpop.f32.mrb[0].mxu0
    %1109 = vdwg.mxu0
    %v1110 = vmax.f32 %v1092, 0.0
    %v1111 = vmax.f32 %v1097, 0.0
    %v1112 = vmax.f32 %v1102, 0.0
    %v1113 = vmax.f32 %v1107, 0.0
    %v1114 = vld [vmem:[%s5 + $0x40] sm:$0xff]
    %v1115 = vld [vmem:[%s5 + $0x48] sm:$0xff]
    %v1116 = vld [vmem:[%s5 + $0x50] sm:$0xff]
    %v1117 = vld [vmem:[%s5 + $0x58] sm:$0xff]
    %v1119 = vsel %vm633, %v1114, 0
    %v1122 = vsel %vm633, %v1115, 0
    %v1125 = vsel %vm633, %v1116, 0
    %v1128 = vsel %vm633, %v1117, 0
    %1130 = vmatprep.subr.mxu0 0.0
    %1131 = vmatpush1.msra.mxu0 %v1110
    %1132 = vmatprep.subr.mxu0 0.0
    %1133 = vmatpush1.msra.mxu0 %v1111
    %1134 = vmatprep.subr.mxu0 0.0
    %1135 = vmatpush1.msra.mxu0 %v1112
    %1136 = vmatprep.subr.mxu0 0.0
    %1137 = vmatpush1.msra.mxu0 %v1113
    %1138 = vmatprep.subr.mxu0 0.0
    %1139 = vmatpush1.msra.mxu0 0.0
    %1140 = vmatprep.subr.mxu0 0.0
    %1141 = vmatpush1.msra.mxu0 0.0
    %1142 = vmatprep.subr.mxu0 0.0
    %1143 = vmatpush1.msra.mxu0 0.0
    %1144 = vmatprep.subr.mxu0 0.0
    %1145 = vmatpush1.msra.mxu0 0.0
    %1146 = vmatprep.subr.mxu0 0.0
    %1147 = vmatpush1.msra.mxu0 0.0
    %1148 = vmatprep.subr.mxu0 0.0
    %1149 = vmatpush1.msra.mxu0 0.0
    %1150 = vmatprep.subr.mxu0 0.0
    %1151 = vmatpush1.msra.mxu0 0.0
    %1152 = vmatprep.subr.mxu0 0.0
    %1153 = vmatpush1.msra.mxu0 0.0
    %1154 = vmatprep.subr.mxu0 0.0
    %1155 = vmatpush1.msra.mxu0 0.0
    %1156 = vmatprep.subr.mxu0 0.0
    %1157 = vmatpush1.msra.mxu0 0.0
    %1158 = vmatprep.subr.mxu0 0.0
    %1159 = vmatpush1.msra.mxu0 0.0
    %1160 = vmatprep.subr.mxu0 0.0
    %1161 = vmatpush1.msra.mxu0 0.0
    %1162 = vmatprep.subr.mxu0 0.0
    %1163 = vmatpush1.msra.mxu0 0.0
    %1164 = vmatprep.subr.mxu0 0.0
    %1165 = vmatpush1.msra.mxu0 0.0
    %1166 = vmatprep.subr.mxu0 0.0
    %1167 = vmatpush1.msra.mxu0 0.0
    %1168 = vmatprep.subr.mxu0 0.0
    %1169 = vmatpush1.msra.mxu0 0.0
    %1170 = vmatprep.subr.mxu0 0.0
    %1171 = vmatpush1.msra.mxu0 0.0
    %1172 = vmatprep.subr.mxu0 0.0
    %1173 = vmatpush1.msra.mxu0 0.0
    %1174 = vmatprep.subr.mxu0 0.0
    %1175 = vmatpush1.msra.mxu0 0.0
    %1176 = vmatprep.subr.mxu0 0.0
    %1177 = vmatpush1.msra.mxu0 0.0
    %1178 = vmatprep.subr.mxu0 0.0
    %1179 = vmatpush1.msra.mxu0 0.0
    %1180 = vmatprep.subr.mxu0 0.0
    %1181 = vmatpush1.msra.mxu0 0.0
    %1182 = vmatprep.subr.mxu0 0.0
    %1183 = vmatpush1.msra.mxu0 0.0
    %1184 = vmatprep.subr.mxu0 0.0
    %1185 = vmatpush1.msra.mxu0 0.0
    %1186 = vmatprep.subr.mxu0 0.0
    %1187 = vmatpush1.msra.mxu0 0.0
    %1188 = vmatprep.subr.mxu0 0.0
    %1189 = vmatpush1.msra.mxu0 0.0
    %1190 = vmatprep.subr.mxu0 0.0
    %1191 = vmatpush1.msra.mxu0 0.0
    %1192 = vmatprep.subr.mxu0 0.0
    %1193 = vmatpush1.msra.mxu0 0.0
    %1194 = vmatprep.mubr.f32.mxu0 0.0
    %1195 = vmatmul.mubr.f32.gmra.mrb[0].mxu0 %v1119
    %v1196 = vpop.f32.mrb[0].mxu0
    %v1197 = vadd.f32 0.0, %v1196
    %v1198 = vpop.f32.mrb[0].mxu0
    %1199 = vmatprep.mubr.f32.mxu0 0.0
    %1200 = vmatmul.mubr.f32.gmra.mrb[0].mxu0 %v1122
    %v1201 = vpop.f32.mrb[0].mxu0
    %v1202 = vadd.f32 0.0, %v1201
    %v1203 = vpop.f32.mrb[0].mxu0
    %1204 = vmatprep.mubr.f32.mxu0 0.0
    %1205 = vmatmul.mubr.f32.gmra.mrb[0].mxu0 %v1125
    %v1206 = vpop.f32.mrb[0].mxu0
    %v1207 = vadd.f32 0.0, %v1206
    %v1208 = vpop.f32.mrb[0].mxu0
    %1209 = vmatprep.mubr.f32.mxu0 0.0
    %1210 = vmatmul.mubr.f32.gmra.mrb[0].mxu0 %v1128
    %v1211 = vpop.f32.mrb[0].mxu0
    %v1212 = vadd.f32 0.0, %v1211
    %v1213 = vpop.f32.mrb[0].mxu0
    %1214 = vdwg.mxu0
    %v1215 = vmax.f32 %v1197, 0.0
    %v1216 = vmax.f32 %v1202, 0.0
    %v1217 = vmax.f32 %v1207, 0.0
    %v1218 = vmax.f32 %v1212, 0.0
    %v1219 = vld [vmem:[%s5 + $0x60] sm:$0xff]
    %v1220 = vld [vmem:[%s5 + $0x68] sm:$0xff]
    %v1221 = vld [vmem:[%s5 + $0x70] sm:$0xff]
    %v1222 = vld [vmem:[%s5 + $0x78] sm:$0xff]
    %v1224 = vsel %vm633, %v1219, 0
    %v1227 = vsel %vm633, %v1220, 0
    %v1230 = vsel %vm633, %v1221, 0
    %v1233 = vsel %vm633, %v1222, 0
    %1235 = vmatprep.subr.mxu0 0.0
    %1236 = vmatpush1.msra.mxu0 %v1215
    %1237 = vmatprep.subr.mxu0 0.0
    %1238 = vmatpush1.msra.mxu0 %v1216
    %1239 = vmatprep.subr.mxu0 0.0
    %1240 = vmatpush1.msra.mxu0 %v1217
    %1241 = vmatprep.subr.mxu0 0.0
    %1242 = vmatpush1.msra.mxu0 %v1218
    %1243 = vmatprep.subr.mxu0 0.0
    %1244 = vmatpush1.msra.mxu0 0.0
    %1245 = vmatprep.subr.mxu0 0.0
    %1246 = vmatpush1.msra.mxu0 0.0
    %1247 = vmatprep.subr.mxu0 0.0
    %1248 = vmatpush1.msra.mxu0 0.0
    %1249 = vmatprep.subr.mxu0 0.0
    %1250 = vmatpush1.msra.mxu0 0.0
    %1251 = vmatprep.subr.mxu0 0.0
    %1252 = vmatpush1.msra.mxu0 0.0
    %1253 = vmatprep.subr.mxu0 0.0
    %1254 = vmatpush1.msra.mxu0 0.0
    %1255 = vmatprep.subr.mxu0 0.0
    %1256 = vmatpush1.msra.mxu0 0.0
    %1257 = vmatprep.subr.mxu0 0.0
    %1258 = vmatpush1.msra.mxu0 0.0
    %1259 = vmatprep.subr.mxu0 0.0
    %1260 = vmatpush1.msra.mxu0 0.0
    %1261 = vmatprep.subr.mxu0 0.0
    %1262 = vmatpush1.msra.mxu0 0.0
    %1263 = vmatprep.subr.mxu0 0.0
    %1264 = vmatpush1.msra.mxu0 0.0
    %1265 = vmatprep.subr.mxu0 0.0
    %1266 = vmatpush1.msra.mxu0 0.0
    %1267 = vmatprep.subr.mxu0 0.0
    %1268 = vmatpush1.msra.mxu0 0.0
    %1269 = vmatprep.subr.mxu0 0.0
    %1270 = vmatpush1.msra.mxu0 0.0
    %1271 = vmatprep.subr.mxu0 0.0
    %1272 = vmatpush1.msra.mxu0 0.0
    %1273 = vmatprep.subr.mxu0 0.0
    %1274 = vmatpush1.msra.mxu0 0.0
    %1275 = vmatprep.subr.mxu0 0.0
    %1276 = vmatpush1.msra.mxu0 0.0
    %1277 = vmatprep.subr.mxu0 0.0
    %1278 = vmatpush1.msra.mxu0 0.0
    %1279 = vmatprep.subr.mxu0 0.0
    %1280 = vmatpush1.msra.mxu0 0.0
    %1281 = vmatprep.subr.mxu0 0.0
    %1282 = vmatpush1.msra.mxu0 0.0
    %1283 = vmatprep.subr.mxu0 0.0
    %1284 = vmatpush1.msra.mxu0 0.0
    %1285 = vmatprep.subr.mxu0 0.0
    %1286 = vmatpush1.msra.mxu0 0.0
    %1287 = vmatprep.subr.mxu0 0.0
    %1288 = vmatpush1.msra.mxu0 0.0
    %1289 = vmatprep.subr.mxu0 0.0
    %1290 = vmatpush1.msra.mxu0 0.0
    %1291 = vmatprep.subr.mxu0 0.0
    %1292 = vmatpush1.msra.mxu0 0.0
    %1293 = vmatprep.subr.mxu0 0.0
    %1294 = vmatpush1.msra.mxu0 0.0
    %1295 = vmatprep.subr.mxu0 0.0
    %1296 = vmatpush1.msra.mxu0 0.0
    %1297 = vmatprep.subr.mxu0 0.0
    %1298 = vmatpush1.msra.mxu0 0.0
    %1299 = vmatprep.mubr.f32.mxu0 0.0
    %1300 = vmatmul.mubr.f32.gmra.mrb[0].mxu0 %v1224
    %v1301 = vpop.f32.mrb[0].mxu0
    %v1302 = vadd.f32 0.0, %v1301
    %v1303 = vpop.f32.mrb[0].mxu0
    %1304 = vmatprep.mubr.f32.mxu0 0.0
    %1305 = vmatmul.mubr.f32.gmra.mrb[0].mxu0 %v1227
    %v1306 = vpop.f32.mrb[0].mxu0
    %v1307 = vpop.f32.mrb[0].mxu0
    %1308 = vmatprep.mubr.f32.mxu0 0.0
    %1309 = vmatmul.mubr.f32.gmra.mrb[0].mxu0 %v1230
    %v1310 = vpop.f32.mrb[0].mxu0
    %v1311 = vpop.f32.mrb[0].mxu0
    %1312 = vmatprep.mubr.f32.mxu0 0.0
    %1313 = vmatmul.mubr.f32.gmra.mrb[0].mxu0 %v1233
    %v1314 = vpop.f32.mrb[0].mxu0
    %v1315 = vpop.f32.mrb[0].mxu0
    %1316 = vdwg.mxu0
    %v1317 = vmul.f32 %v1302, %v48
    %v1319 = vrot.slane %v49, 7
    %v1321 = vmul.f32 %v1302, %v1319
    %v1322 = vsub.f32 %v1317, %v255
    %1324 = vset.pattern.permute.xlu0 2
    %1325 = vperm.xlu0 %1324, %v456
    %v1326 = vpop.permute.xlu0 %1325
    %v1329 = vrot.slane %v1321, 1
    %v1331 = vmul.f32 %v1326, %v1329
    %v1332 = vadd.f32 %v1322, %v1331
    %v1333 = vmul.f32 %v1332, %v339
    %v1334 = vadd.f32 %v45, %v1333
    %vm1335 = vcmp.ge.f32.partialorder %v1334, 0.0
    %v1336 = vsel %vm1335, 1.0, -1.0
    %v1337 = vand.u32 2147483647, %v1334
    %v1338 = vsub.f32 %v1337, %v345
    %v1339 = vmax.f32 %v1338, 0.0
    %v1340 = vmul.f32 %v1336, %v1339
    %1341 = vst [vmem:[#allocation6] sm:$0x1] %v1340
    // Predicated region
    $region30: #{tpu_custom_call.1} parent=1 // pred_check
      _
    $region31: #{tpu_custom_call.1} parent=1 // pred_check_branch
      %1343 = sbr.rel (0) target = $region33
    $region32: #{tpu_custom_call.1} parent=1 // pred_region
      %s1345 = ssub.s32 16, 16
      %1346 = vsyncadd [#allocation4], %s1345
      %s1348 = sshll.u32 [#allocation6], 4
      %s1349 = int_to_ptr.vmem [resolvable:$true] %s1348
      %1351 = dma.vmem_to_hbm [thread:$0]  %s1349, 16, %s6, [#allocation4]
    $region33: #{tpu_custom_call.1} parent=1 // pred_fallthru
      _
    // Predicated region
    $region34: #{tpu_custom_call.1} parent=1 // pred_check
      _
    $region35: #{tpu_custom_call.1} parent=1 // pred_check_branch
      %1353 = sbr.rel (0) target = $region37
    $region36: #{tpu_custom_call.1} parent=1 // pred_region
      %1354 = dma.done [#allocation4], 16
    $region37: #{tpu_custom_call.1} parent=1 // pred_fallthru
      _
    %1355 = vsyncpa [#allocation4], 1
    %1356 = vsyncpa [#allocation5], 1

</llo_original>
